<compile_context>
chip_gen: v6e
topology: v6e:2x2x1
jax: 0.10.0
libtpu: 0.0.40
codegen_flags: <defaults>
</compile_context>

<pallas_src>
import math
import functools

import jax
import jax.numpy as jnp
from jax.experimental import pallas as pl
from jax.experimental.pallas import tpu as pltpu


def _mha_kernel(q_ref, k_ref, v_ref, mask_ref,
                wq_ref, bq_ref, wk_ref, bk_ref,
                wv_ref, bv_ref, wo_ref, bo_ref,
                out_ref, cache_ref,
                kh_scratch, vh_scratch,
                *, n_head, d_k):
    qt = pl.program_id(1)
    cdt = q_ref.dtype                      # MXU operand dtype (bf16-friendly)
    T2 = k_ref.shape[1]
    scale = 1.0 / math.sqrt(d_k)

    # ---- K/V projection + cache emission: once per batch element -----------
    @pl.when(qt == 0)
    def _():
        key = k_ref[0]                     # (T2, F)
        value = v_ref[0]                   # (T2, F)
        k_p = jnp.dot(key, wk_ref[...], preferred_element_type=jnp.float32) + bk_ref[0]
        v_p = jnp.dot(value, wv_ref[...], preferred_element_type=jnp.float32) + bv_ref[0]
        k_h = k_p.reshape(T2, n_head, d_k).transpose(1, 0, 2).astype(cdt)   # (H,T2,dk)
        v_h = v_p.reshape(T2, n_head, d_k).transpose(1, 0, 2).astype(cdt)   # (H,T2,dk)
        kh_scratch[...] = k_h
        vh_scratch[...] = v_h
        # new_cache = concat(k, v, axis=-1) in (H, T2, 2*d_k) layout.
        cache_ref[0] = jnp.concatenate([k_h, v_h], axis=-1).astype(cache_ref.dtype)

    # ---- Q projection for this q-tile ---------------------------------------
    query = q_ref[0]                       # (tq, F)
    q_p = jnp.dot(query, wq_ref[...], preferred_element_type=jnp.float32) + bq_ref[0]
    q_p = q_p * scale                      # fold 1/sqrt(d_k) once
    tq = q_p.shape[0]
    q_h = q_p.reshape(tq, n_head, d_k).transpose(1, 0, 2).astype(cdt)       # (H,tq,dk)

    k_h = kh_scratch[...]                  # (H, T2, d_k)
    v_h = vh_scratch[...]                  # (H, T2, d_k)

    # ---- attention (heads batched) -------------------------------------------
    keep = mask_ref[0] != 0                              # (1,T2) or (tq,T2)
    bias = jnp.where(keep, 0.0, -1e30).astype(jnp.float32)

    scores = jax.lax.dot_general(                         # (H, tq, T2)
        q_h, k_h, (((2,), (2,)), ((0,), (0,))),
        preferred_element_type=jnp.float32)
    scores = scores + bias                                # broadcast over heads

    m = jnp.max(scores, axis=-1, keepdims=True)
    e = jnp.exp(scores - m)
    s = jnp.sum(e, axis=-1, keepdims=True)
    # approx=True would move this fully onto the EUP; kept exact to preserve
    # reference-level accuracy for the correctness check below.
    attn = e * pl.reciprocal(s, approx=False)
    attn = jnp.where(keep, attn, 0.0)      # zero masked cols; handles fully-masked rows
    # TODO(synk): dropout on attn is identity at inference; training-mode dropout
    # is not implemented.

    ctx = jax.lax.dot_general(                            # (H, tq, d_k)
        attn.astype(cdt), v_h, (((2,), (1,)), ((0,), (0,))),
        preferred_element_type=jnp.float32)
    ctx = ctx.transpose(1, 0, 2).reshape(tq, n_head * d_k)  # (tq, F)

    out = jnp.dot(ctx.astype(cdt), wo_ref[...],
                  preferred_element_type=jnp.float32) + bo_ref[0]
    out_ref[0] = out.astype(out_ref.dtype)


def multi_headed_attention(query, key, value, params, mask=None, *,
                           n_head, q_tile=256):
    """Returns (out (B,T1,F), new_cache (B, n_head, T2, 2*d_k))."""
    B, T1, F = query.shape
    T2 = key.shape[1]
    d_k = F // n_head

    # q-tile: use q_tile rows per grid step when it divides T1, else full T1.
    # TODO(synk): pad/ragged q-tiling for T1 not divisible by q_tile.
    tq = q_tile if (T1 > q_tile and T1 % q_tile == 0) else T1
    n_qt = T1 // tq

    # Mask glue: missing / empty mask == attend everywhere. Keep it compact —
    # (B,1,T2) padding masks stay (B,1,T2); (B,T1,T2) masks stay as-is.
    if mask is None or mask.shape[-1] == 0:
        mask = jnp.ones((B, 1, T2), dtype=jnp.int32)
    else:
        mask = mask.astype(jnp.int32)
    Tm = mask.shape[1]
    assert Tm in (1, T1), "mask must be (B,1,T2) or (B,T1,T2)"

    # Pre-transpose Linear weights to (in, out); biases as (1, F).
    wq_t, wk_t = params["wq"].T, params["wk"].T
    wv_t, wo_t = params["wv"].T, params["wo"].T
    bq = params["bq"].reshape(1, F)
    bk = params["bk"].reshape(1, F)
    bv = params["bv"].reshape(1, F)
    bo = params["bo"].reshape(1, F)

    q_spec = pl.BlockSpec((1, tq, F), lambda b, qt: (b, qt, 0))
    kv_spec = pl.BlockSpec((1, T2, F), lambda b, qt: (b, 0, 0))
    if Tm == 1:
        mask_spec = pl.BlockSpec((1, 1, T2), lambda b, qt: (b, 0, 0))
    else:
        mask_spec = pl.BlockSpec((1, tq, T2), lambda b, qt: (b, qt, 0))
    w_spec = pl.BlockSpec((F, F), lambda b, qt: (0, 0))
    b_spec = pl.BlockSpec((1, F), lambda b, qt: (0, 0))

    out, new_cache = pl.pallas_call(
        functools.partial(_mha_kernel, n_head=n_head, d_k=d_k),
        grid=(B, n_qt),
        in_specs=[q_spec, kv_spec, kv_spec, mask_spec,
                  w_spec, b_spec, w_spec, b_spec,
                  w_spec, b_spec, w_spec, b_spec],
        out_specs=[pl.BlockSpec((1, tq, F), lambda b, qt: (b, qt, 0)),
                   pl.BlockSpec((1, n_head, T2, 2 * d_k),
                                lambda b, qt: (b, 0, 0, 0))],
        out_shape=[jax.ShapeDtypeStruct((B, T1, F), query.dtype),
                   jax.ShapeDtypeStruct((B, n_head, T2, 2 * d_k), query.dtype)],
        scratch_shapes=[pltpu.VMEM((n_head, T2, d_k), query.dtype),
                        pltpu.VMEM((n_head, T2, d_k), query.dtype)],
        compiler_params=pltpu.CompilerParams(
            dimension_semantics=("parallel", "arbitrary")),
    )(query, key, value, mask,
      wq_t, bq, wk_t, bk, wv_t, bv, wo_t, bo)

    # TODO(synk): pre-existing KV-cache concat path (cache.shape[0] > 0) is not
    # wired into the kernel; callers with a non-empty cache must concat outside.
    return out, new_cache


def _reference(query, key, value, mask, params, n_head):
    """Pure-JAX reference mirroring the PyTorch forward (eval mode)."""
    B, T1, F = query.shape
    T2 = key.shape[1]
    d_k = F // n_head
    q = query @ params["wq"].T + params["bq"]
    k = key @ params["wk"].T + params["bk"]
    v = value @ params["wv"].T + params["bv"]
    q = q.reshape(B, T1, n_head, d_k).transpose(0, 2, 1, 3)
    k = k.reshape(B, T2, n_head, d_k).transpose(0, 2, 1, 3)
    v = v.reshape(B, T2, n_head, d_k).transpose(0, 2, 1, 3)
    scores = jnp.einsum("bhqd,bhkd->bhqk", q, k) / math.sqrt(d_k)
    keep = (mask != 0)[:, None, :, :]
    scores = jnp.where(keep, scores, -jnp.inf)
    attn = jax.nn.softmax(scores, axis=-1)
    attn = jnp.where(keep, attn, 0.0)
    x = jnp.einsum("bhqk,bhkd->bhqd", attn, v)
    x = x.transpose(0, 2, 1, 3).reshape(B, T1, F)
    out = x @ params["wo"].T + params["bo"]
    new_cache = jnp.concatenate([k, v], axis=-1)
    return out, new_cache


if __name__ == "__main__":
    B, T1, T2 = 2, 8, 8
    n_feat, n_head = 32, 4

    key0 = jax.random.PRNGKey(0)
    keys = jax.random.split(key0, 12)

    # Deterministic parameter init (nn.Linear-like uniform bound 1/sqrt(fan_in)).
    bound = 1.0 / math.sqrt(n_feat)
    params = {
        "wq": jax.random.uniform(keys[0], (n_feat, n_feat), jnp.float32, -bound, bound),
        "bq": jax.random.uniform(keys[1], (n_feat,), jnp.float32, -bound, bound),
        "wk": jax.random.uniform(keys[2], (n_feat, n_feat), jnp.float32, -bound, bound),
        "bk": jax.random.uniform(keys[3], (n_feat,), jnp.float32, -bound, bound),
        "wv": jax.random.uniform(keys[4], (n_feat, n_feat), jnp.float32, -bound, bound),
        "bv": jax.random.uniform(keys[5], (n_feat,), jnp.float32, -bound, bound),
        "wo": jax.random.uniform(keys[6], (n_feat, n_feat), jnp.float32, -bound, bound),
        "bo": jax.random.uniform(keys[7], (n_feat,), jnp.float32, -bound, bound),
    }

    query = jax.random.normal(keys[8], (B, T1, n_feat), jnp.float32)
    key_in = jax.random.normal(keys[9], (B, T2, n_feat), jnp.float32)
    value = jax.random.normal(keys[10], (B, T2, n_feat), jnp.float32)

    # Padding mask (B, 1, T2): batch 0 fully valid, batch 1 has last 2 frames padded.
    mask = jnp.ones((B, 1, T2), dtype=jnp.int32)
    mask = mask.at[1, 0, T2 - 2:].set(0)

    out, new_cache = multi_headed_attention(
        query, key_in, value, params, mask=mask, n_head=n_head)
    out = jax.block_until_ready(out)
    new_cache = jax.block_until_ready(new_cache)

    ref_out, ref_cache = _reference(
        query, key_in, value, jnp.broadcast_to(mask, (B, T1, T2)), params, n_head)
    assert out.shape == (B, T1, n_feat)
    assert new_cache.shape == (B, n_head, T2, 2 * (n_feat // n_head))
    assert jnp.allclose(out, ref_out, atol=1e-4, rtol=1e-4)
    assert jnp.allclose(new_cache, ref_cache, atol=1e-4, rtol=1e-4)

    print("KERNEL_OK")
</pallas_src>

<mosaic_0001>
module attributes {stable_mosaic.version = 11 : i64} {
  func.func @_mha_kernel(%arg0: i32, %arg1: i32, %arg2: memref<1x8x32xf32, #tpu.memory_space<vmem>>, %arg3: memref<1x8x32xf32, #tpu.memory_space<vmem>>, %arg4: memref<1x8x32xf32, #tpu.memory_space<vmem>>, %arg5: memref<1x1x8xi32, #tpu.memory_space<vmem>>, %arg6: memref<32x32xf32, #tpu.memory_space<vmem>>, %arg7: memref<1x32xf32, #tpu.memory_space<vmem>>, %arg8: memref<32x32xf32, #tpu.memory_space<vmem>>, %arg9: memref<1x32xf32, #tpu.memory_space<vmem>>, %arg10: memref<32x32xf32, #tpu.memory_space<vmem>>, %arg11: memref<1x32xf32, #tpu.memory_space<vmem>>, %arg12: memref<32x32xf32, #tpu.memory_space<vmem>>, %arg13: memref<1x32xf32, #tpu.memory_space<vmem>>, %arg14: memref<1x8x32xf32, #tpu.memory_space<vmem>>, %arg15: memref<1x4x8x16xf32, #tpu.memory_space<vmem>>, %arg16: memref<4x8x8xf32, #tpu.memory_space<vmem>>, %arg17: memref<4x8x8xf32, #tpu.memory_space<vmem>>) attributes {dimension_semantics = [#tpu.dimension_semantics<parallel>, #tpu.dimension_semantics<arbitrary>], iteration_bounds = array<i64: 2, 1>, scalar_prefetch = 0 : i64, scratch_operands = 2 : i64, tpu.core_type = #tpu.core_type<tc>, window_params = [{transform_indices = @transform_0, window_bounds = array<i64: 1, 8, 32>}, {transform_indices = @transform_1, window_bounds = array<i64: 1, 8, 32>}, {transform_indices = @transform_2, window_bounds = array<i64: 1, 8, 32>}, {transform_indices = @transform_3, window_bounds = array<i64: 1, 1, 8>}, {pipeline_mode = #tpu.pipeline_mode<synchronous>, transform_indices = @transform_4, window_bounds = array<i64: 32, 32>}, {pipeline_mode = #tpu.pipeline_mode<synchronous>, transform_indices = @transform_5, window_bounds = array<i64: 1, 32>}, {pipeline_mode = #tpu.pipeline_mode<synchronous>, transform_indices = @transform_6, window_bounds = array<i64: 32, 32>}, {pipeline_mode = #tpu.pipeline_mode<synchronous>, transform_indices = @transform_7, window_bounds = array<i64: 1, 32>}, {pipeline_mode = #tpu.pipeline_mode<synchronous>, transform_indices = @transform_8, window_bounds = array<i64: 32, 32>}, {pipeline_mode = #tpu.pipeline_mode<synchronous>, transform_indices = @transform_9, window_bounds = array<i64: 1, 32>}, {pipeline_mode = #tpu.pipeline_mode<synchronous>, transform_indices = @transform_10, window_bounds = array<i64: 32, 32>}, {pipeline_mode = #tpu.pipeline_mode<synchronous>, transform_indices = @transform_11, window_bounds = array<i64: 1, 32>}, {transform_indices = @transform_12, window_bounds = array<i64: 1, 8, 32>}, {transform_indices = @transform_13, window_bounds = array<i64: 1, 4, 8, 16>}]} {
    %c0_i32 = arith.constant 0 : i32
    %0 = arith.cmpi eq, %arg1, %c0_i32 : i32
    %1 = arith.extui %0 : i1 to i32
    %c0_i32_0 = arith.constant 0 : i32
    %2 = arith.cmpi ne, %1, %c0_i32_0 : i32
    scf.if %2 {
      %c0_33 = arith.constant 0 : index
      %c0_34 = arith.constant 0 : index
      %c0_35 = arith.constant 0 : index
      %56 = vector.load %arg3[%c0_33, %c0_34, %c0_35] : memref<1x8x32xf32, #tpu.memory_space<vmem>>, vector<1x8x32xf32>
      %57 = vector.shape_cast %56 : vector<1x8x32xf32> to vector<8x32xf32>
      %c0_36 = arith.constant 0 : index
      %c0_37 = arith.constant 0 : index
      %c0_38 = arith.constant 0 : index
      %58 = vector.load %arg4[%c0_36, %c0_37, %c0_38] : memref<1x8x32xf32, #tpu.memory_space<vmem>>, vector<1x8x32xf32>
      %59 = vector.shape_cast %58 : vector<1x8x32xf32> to vector<8x32xf32>
      %c0_39 = arith.constant 0 : index
      %c0_40 = arith.constant 0 : index
      %60 = vector.load %arg8[%c0_39, %c0_40] : memref<32x32xf32, #tpu.memory_space<vmem>>, vector<32x32xf32>
      %cst_41 = arith.constant dense<0.000000e+00> : vector<8x32xf32>
      %61 = tpu.matmul %57, %60, %cst_41 {dimension_numbers = #tpu.dot_dimension_numbers<[1], [0], [0], [1], [0, 0, 1, 1], [], []>} : vector<8x32xf32>, vector<32x32xf32>, vector<8x32xf32> -> vector<8x32xf32>
      %c0_42 = arith.constant 0 : index
      %c0_43 = arith.constant 0 : index
      %62 = vector.load %arg9[%c0_42, %c0_43] : memref<1x32xf32, #tpu.memory_space<vmem>>, vector<1x32xf32>
      %63 = vector.shape_cast %62 : vector<1x32xf32> to vector<32xf32>
      %64 = vector.shape_cast %63 : vector<32xf32> to vector<1x32xf32>
      %65 = vector.broadcast %64 : vector<1x32xf32> to vector<8x32xf32>
      %66 = arith.addf %61, %65 : vector<8x32xf32>
      %c0_44 = arith.constant 0 : index
      %c0_45 = arith.constant 0 : index
      %67 = vector.load %arg10[%c0_44, %c0_45] : memref<32x32xf32, #tpu.memory_space<vmem>>, vector<32x32xf32>
      %cst_46 = arith.constant dense<0.000000e+00> : vector<8x32xf32>
      %68 = tpu.matmul %59, %67, %cst_46 {dimension_numbers = #tpu.dot_dimension_numbers<[1], [0], [0], [1], [0, 0, 1, 1], [], []>} : vector<8x32xf32>, vector<32x32xf32>, vector<8x32xf32> -> vector<8x32xf32>
      %c0_47 = arith.constant 0 : index
      %c0_48 = arith.constant 0 : index
      %69 = vector.load %arg11[%c0_47, %c0_48] : memref<1x32xf32, #tpu.memory_space<vmem>>, vector<1x32xf32>
      %70 = vector.shape_cast %69 : vector<1x32xf32> to vector<32xf32>
      %71 = vector.shape_cast %70 : vector<32xf32> to vector<1x32xf32>
      %72 = vector.broadcast %71 : vector<1x32xf32> to vector<8x32xf32>
      %73 = arith.addf %68, %72 : vector<8x32xf32>
      %74 = vector.shape_cast %66 : vector<8x32xf32> to vector<8x4x8xf32>
      %75 = tpu.transpose %74, [1, 0, 2] : vector<8x4x8xf32> -> vector<4x8x8xf32>
      %76 = vector.shape_cast %73 : vector<8x32xf32> to vector<8x4x8xf32>
      %77 = tpu.transpose %76, [1, 0, 2] : vector<8x4x8xf32> -> vector<4x8x8xf32>
      %c0_49 = arith.constant 0 : index
      %c0_50 = arith.constant 0 : index
      %c0_51 = arith.constant 0 : index
      %78 = vector.load %arg16[%c0_49, %c0_50, %c0_51] : memref<4x8x8xf32, #tpu.memory_space<vmem>>, vector<4x8x8xf32>
      tpu.vector_store %arg16[%c0_49, %c0_50, %c0_51], %75 {strides = array<i32>} : memref<4x8x8xf32, #tpu.memory_space<vmem>>, vector<4x8x8xf32>,
      %c0_52 = arith.constant 0 : index
      %c0_53 = arith.constant 0 : index
      %c0_54 = arith.constant 0 : index
      %79 = vector.load %arg17[%c0_52, %c0_53, %c0_54] : memref<4x8x8xf32, #tpu.memory_space<vmem>>, vector<4x8x8xf32>
      tpu.vector_store %arg17[%c0_52, %c0_53, %c0_54], %77 {strides = array<i32>} : memref<4x8x8xf32, #tpu.memory_space<vmem>>, vector<4x8x8xf32>,
      %80 = tpu.concatenate %75, %77 in 2 : vector<4x8x8xf32>, vector<4x8x8xf32> -> vector<4x8x16xf32>
      %c0_55 = arith.constant 0 : index
      %c0_56 = arith.constant 0 : index
      %c0_57 = arith.constant 0 : index
      %c0_58 = arith.constant 0 : index
      %81 = vector.load %arg15[%c0_55, %c0_56, %c0_57, %c0_58] : memref<1x4x8x16xf32, #tpu.memory_space<vmem>>, vector<1x4x8x16xf32>
      %82 = vector.shape_cast %81 : vector<1x4x8x16xf32> to vector<4x8x16xf32>
      %83 = vector.shape_cast %80 : vector<4x8x16xf32> to vector<1x4x8x16xf32>
      tpu.vector_store %arg15[%c0_55, %c0_56, %c0_57, %c0_58], %83 {strides = array<i32>} : memref<1x4x8x16xf32, #tpu.memory_space<vmem>>, vector<1x4x8x16xf32>,
    } else {
    }
    %c0 = arith.constant 0 : index
    %c0_1 = arith.constant 0 : index
    %c0_2 = arith.constant 0 : index
    %3 = vector.load %arg2[%c0, %c0_1, %c0_2] : memref<1x8x32xf32, #tpu.memory_space<vmem>>, vector<1x8x32xf32>
    %4 = vector.shape_cast %3 : vector<1x8x32xf32> to vector<8x32xf32>
    %c0_3 = arith.constant 0 : index
    %c0_4 = arith.constant 0 : index
    %5 = vector.load %arg6[%c0_3, %c0_4] : memref<32x32xf32, #tpu.memory_space<vmem>>, vector<32x32xf32>
    %cst = arith.constant dense<0.000000e+00> : vector<8x32xf32>
    %6 = tpu.matmul %4, %5, %cst {dimension_numbers = #tpu.dot_dimension_numbers<[1], [0], [0], [1], [0, 0, 1, 1], [], []>} : vector<8x32xf32>, vector<32x32xf32>, vector<8x32xf32> -> vector<8x32xf32>
    %c0_5 = arith.constant 0 : index
    %c0_6 = arith.constant 0 : index
    %7 = vector.load %arg7[%c0_5, %c0_6] : memref<1x32xf32, #tpu.memory_space<vmem>>, vector<1x32xf32>
    %8 = vector.shape_cast %7 : vector<1x32xf32> to vector<32xf32>
    %9 = vector.shape_cast %8 : vector<32xf32> to vector<1x32xf32>
    %10 = vector.broadcast %9 : vector<1x32xf32> to vector<8x32xf32>
    %11 = arith.addf %6, %10 : vector<8x32xf32>
    %cst_7 = arith.constant 0.353553385 : f32
    %12 = vector.broadcast %cst_7 : f32 to vector<8x32xf32>
    %13 = arith.mulf %11, %12 : vector<8x32xf32>
    %14 = vector.shape_cast %13 : vector<8x32xf32> to vector<8x4x8xf32>
    %15 = tpu.transpose %14, [1, 0, 2] : vector<8x4x8xf32> -> vector<4x8x8xf32>
    %c0_8 = arith.constant 0 : index
    %c0_9 = arith.constant 0 : index
    %c0_10 = arith.constant 0 : index
    %16 = vector.load %arg16[%c0_8, %c0_9, %c0_10] : memref<4x8x8xf32, #tpu.memory_space<vmem>>, vector<4x8x8xf32>
    %c0_11 = arith.constant 0 : index
    %c0_12 = arith.constant 0 : index
    %c0_13 = arith.constant 0 : index
    %17 = vector.load %arg17[%c0_11, %c0_12, %c0_13] : memref<4x8x8xf32, #tpu.memory_space<vmem>>, vector<4x8x8xf32>
    %c0_14 = arith.constant 0 : index
    %c0_15 = arith.constant 0 : index
    %c0_16 = arith.constant 0 : index
    %18 = vector.load %arg5[%c0_14, %c0_15, %c0_16] : memref<1x1x8xi32, #tpu.memory_space<vmem>>, vector<1x1x8xi32>
    %19 = vector.shape_cast %18 : vector<1x1x8xi32> to vector<1x8xi32>
    %c0_i32_17 = arith.constant 0 : i32
    %20 = vector.broadcast %c0_i32_17 : i32 to vector<1x8xi32>
    %21 = arith.cmpi ne, %19, %20 : vector<1x8xi32>
    %cst_18 = arith.constant 0.000000e+00 : f32
    %cst_19 = arith.constant -1.000000e+30 : f32
    %22 = vector.broadcast %cst_18 : f32 to vector<1x8xf32>
    %23 = vector.broadcast %cst_19 : f32 to vector<1x8xf32>
    %24 = arith.select %21, %22, %23 : vector<1x8xi1>, vector<1x8xf32>
    %cst_20 = arith.constant dense<0.000000e+00> : vector<4x8x8xf32>
    %25 = tpu.matmul %15, %16, %cst_20 {dimension_numbers = #tpu.dot_dimension_numbers<[2], [2], [1], [1], [0, 0, 0, 1, 1, 1], [0], [0]>} : vector<4x8x8xf32>, vector<4x8x8xf32>, vector<4x8x8xf32> -> vector<4x8x8xf32>
    %26 = vector.shape_cast %24 : vector<1x8xf32> to vector<1x1x8xf32>
    %27 = vector.broadcast %26 : vector<1x1x8xf32> to vector<4x8x8xf32>
    %28 = arith.addf %25, %27 : vector<4x8x8xf32>
    %cst_21 = arith.constant dense<0xFF800000> : vector<4x8xf32>
    %29 = vector.multi_reduction <maximumf>, %28, %cst_21 [2] : vector<4x8x8xf32> to vector<4x8xf32>
    %30 = vector.shape_cast %29 : vector<4x8xf32> to vector<4x8x1xf32>
    %31 = vector.broadcast %30 : vector<4x8x1xf32> to vector<4x8x8xf32>
    %32 = arith.subf %28, %31 : vector<4x8x8xf32>
    %33 = math.exp %32 : vector<4x8x8xf32>
    %cst_22 = arith.constant dense<0.000000e+00> : vector<4x8xf32>
    %34 = vector.multi_reduction <add>, %33, %cst_22 [2] : vector<4x8x8xf32> to vector<4x8xf32>
    %35 = vector.shape_cast %34 : vector<4x8xf32> to vector<4x8x1xf32>
    %36 = tpu.reciprocal %35 : vector<4x8x1xf32> -> vector<4x8x1xf32>
    %37 = vector.broadcast %36 : vector<4x8x1xf32> to vector<4x8x8xf32>
    %38 = arith.mulf %33, %37 : vector<4x8x8xf32>
    %cst_23 = arith.constant 0.000000e+00 : f32
    %39 = vector.shape_cast %21 : vector<1x8xi1> to vector<1x1x8xi1>
    %40 = vector.broadcast %39 : vector<1x1x8xi1> to vector<4x8x8xi1>
    %41 = vector.broadcast %cst_23 : f32 to vector<4x8x8xf32>
    %42 = arith.select %40, %38, %41 : vector<4x8x8xi1>, vector<4x8x8xf32>
    %cst_24 = arith.constant dense<0.000000e+00> : vector<4x8x8xf32>
    %43 = tpu.matmul %42, %17, %cst_24 {dimension_numbers = #tpu.dot_dimension_numbers<[2], [1], [1], [2], [0, 0, 0, 1, 1, 2], [0], [0]>} : vector<4x8x8xf32>, vector<4x8x8xf32>, vector<4x8x8xf32> -> vector<4x8x8xf32>
    %44 = tpu.transpose %43, [1, 0, 2] : vector<4x8x8xf32> -> vector<8x4x8xf32>
    %45 = vector.shape_cast %44 : vector<8x4x8xf32> to vector<8x32xf32>
    %c0_25 = arith.constant 0 : index
    %c0_26 = arith.constant 0 : index
    %46 = vector.load %arg12[%c0_25, %c0_26] : memref<32x32xf32, #tpu.memory_space<vmem>>, vector<32x32xf32>
    %cst_27 = arith.constant dense<0.000000e+00> : vector<8x32xf32>
    %47 = tpu.matmul %45, %46, %cst_27 {dimension_numbers = #tpu.dot_dimension_numbers<[1], [0], [0], [1], [0, 0, 1, 1], [], []>} : vector<8x32xf32>, vector<32x32xf32>, vector<8x32xf32> -> vector<8x32xf32>
    %c0_28 = arith.constant 0 : index
    %c0_29 = arith.constant 0 : index
    %48 = vector.load %arg13[%c0_28, %c0_29] : memref<1x32xf32, #tpu.memory_space<vmem>>, vector<1x32xf32>
    %49 = vector.shape_cast %48 : vector<1x32xf32> to vector<32xf32>
    %50 = vector.shape_cast %49 : vector<32xf32> to vector<1x32xf32>
    %51 = vector.broadcast %50 : vector<1x32xf32> to vector<8x32xf32>
    %52 = arith.addf %47, %51 : vector<8x32xf32>
    %c0_30 = arith.constant 0 : index
    %c0_31 = arith.constant 0 : index
    %c0_32 = arith.constant 0 : index
    %53 = vector.load %arg14[%c0_30, %c0_31, %c0_32] : memref<1x8x32xf32, #tpu.memory_space<vmem>>, vector<1x8x32xf32>
    %54 = vector.shape_cast %53 : vector<1x8x32xf32> to vector<8x32xf32>
    %55 = vector.shape_cast %52 : vector<8x32xf32> to vector<1x8x32xf32>
    tpu.vector_store %arg14[%c0_30, %c0_31, %c0_32], %55 {strides = array<i32>} : memref<1x8x32xf32, #tpu.memory_space<vmem>>, vector<1x8x32xf32>,
    return
  }
  func.func @transform_0(%arg0: i32, %arg1: i32) -> (i32, i32, i32) {
    %c0_i32 = arith.constant 0 : i32
    %c0_i32_0 = arith.constant 0 : i32
    return %arg0, %arg1, %c0_i32 : i32, i32, i32
  }
  func.func @transform_1(%arg0: i32, %arg1: i32) -> (i32, i32, i32) {
    %c0_i32 = arith.constant 0 : i32
    %c0_i32_0 = arith.constant 0 : i32
    %c0_i32_1 = arith.constant 0 : i32
    return %arg0, %c0_i32, %c0_i32_0 : i32, i32, i32
  }
  func.func @transform_2(%arg0: i32, %arg1: i32) -> (i32, i32, i32) {
    %c0_i32 = arith.constant 0 : i32
    %c0_i32_0 = arith.constant 0 : i32
    %c0_i32_1 = arith.constant 0 : i32
    return %arg0, %c0_i32, %c0_i32_0 : i32, i32, i32
  }
  func.func @transform_3(%arg0: i32, %arg1: i32) -> (i32, i32, i32) {
    %c0_i32 = arith.constant 0 : i32
    %c0_i32_0 = arith.constant 0 : i32
    %c0_i32_1 = arith.constant 0 : i32
    return %arg0, %c0_i32, %c0_i32_0 : i32, i32, i32
  }
  func.func @transform_4(%arg0: i32, %arg1: i32) -> (i32, i32) {
    %c0_i32 = arith.constant 0 : i32
    %c0_i32_0 = arith.constant 0 : i32
    %c0_i32_1 = arith.constant 0 : i32
    return %c0_i32, %c0_i32_0 : i32, i32
  }
  func.func @transform_5(%arg0: i32, %arg1: i32) -> (i32, i32) {
    %c0_i32 = arith.constant 0 : i32
    %c0_i32_0 = arith.constant 0 : i32
    %c0_i32_1 = arith.constant 0 : i32
    return %c0_i32, %c0_i32_0 : i32, i32
  }
  func.func @transform_6(%arg0: i32, %arg1: i32) -> (i32, i32) {
    %c0_i32 = arith.constant 0 : i32
    %c0_i32_0 = arith.constant 0 : i32
    %c0_i32_1 = arith.constant 0 : i32
    return %c0_i32, %c0_i32_0 : i32, i32
  }
  func.func @transform_7(%arg0: i32, %arg1: i32) -> (i32, i32) {
    %c0_i32 = arith.constant 0 : i32
    %c0_i32_0 = arith.constant 0 : i32
    %c0_i32_1 = arith.constant 0 : i32
    return %c0_i32, %c0_i32_0 : i32, i32
  }
  func.func @transform_8(%arg0: i32, %arg1: i32) -> (i32, i32) {
    %c0_i32 = arith.constant 0 : i32
    %c0_i32_0 = arith.constant 0 : i32
    %c0_i32_1 = arith.constant 0 : i32
    return %c0_i32, %c0_i32_0 : i32, i32
  }
  func.func @transform_9(%arg0: i32, %arg1: i32) -> (i32, i32) {
    %c0_i32 = arith.constant 0 : i32
    %c0_i32_0 = arith.constant 0 : i32
    %c0_i32_1 = arith.constant 0 : i32
    return %c0_i32, %c0_i32_0 : i32, i32
  }
  func.func @transform_10(%arg0: i32, %arg1: i32) -> (i32, i32) {
    %c0_i32 = arith.constant 0 : i32
    %c0_i32_0 = arith.constant 0 : i32
    %c0_i32_1 = arith.constant 0 : i32
    return %c0_i32, %c0_i32_0 : i32, i32
  }
  func.func @transform_11(%arg0: i32, %arg1: i32) -> (i32, i32) {
    %c0_i32 = arith.constant 0 : i32
    %c0_i32_0 = arith.constant 0 : i32
    %c0_i32_1 = arith.constant 0 : i32
    return %c0_i32, %c0_i32_0 : i32, i32
  }
  func.func @transform_12(%arg0: i32, %arg1: i32) -> (i32, i32, i32) {
    %c0_i32 = arith.constant 0 : i32
    %c0_i32_0 = arith.constant 0 : i32
    return %arg0, %arg1, %c0_i32 : i32, i32, i32
  }
  func.func @transform_13(%arg0: i32, %arg1: i32) -> (i32, i32, i32, i32) {
    %c0_i32 = arith.constant 0 : i32
    %c0_i32_0 = arith.constant 0 : i32
    %c0_i32_1 = arith.constant 0 : i32
    %c0_i32_2 = arith.constant 0 : i32
    return %arg0, %c0_i32, %c0_i32_0, %c0_i32_1 : i32, i32, i32, i32
  }
}

</mosaic_0001>

<llo_original>
// kernel: tpu_custom_call.1
$region0: #{tpu_custom_call.1}
  #allocation0 [shape = 'u32[]', space=smem, size = 0x4, offset = 0x4, fixed_abs, tag = 'smem constant byte address 0x4 - core index']
  #allocation1 [shape = 'u32[144,128]{1,0:T(1,128)}', space=vmem, size = 0x12000, scoped, tag = 'internal scratch']
  #allocation2 [shape = 'f32[4,8,8]{2,1,0:T(8,128)}', space=vmem, size = 0x4000, scoped, tag = 'scratch operand']
  #allocation3 [shape = 'f32[4,8,8]{2,1,0:T(8,128)}', space=vmem, size = 0x4000, scoped, tag = 'scratch operand']
  %s0 = inlined_call_operand.hbm [shape: f32[2,8,32], index: 0, kind: input, shape index: {}]
  %s1 = inlined_call_operand.hbm [shape: f32[2,8,32], index: 1, kind: input, shape index: {}]
  %s2 = inlined_call_operand.hbm [shape: f32[2,8,32], index: 2, kind: input, shape index: {}]
  %s3 = inlined_call_operand.vmem [shape: s32[2,1,8], index: 3, kind: input, shape index: {}]
  %s4 = inlined_call_operand.hbm [shape: f32[32,32], index: 4, kind: input, shape index: {}]
  %s5 = inlined_call_operand.vmem [shape: f32[1,32], index: 5, kind: input, shape index: {}]
  %s6 = inlined_call_operand.hbm [shape: f32[32,32], index: 6, kind: input, shape index: {}]
  %s7 = inlined_call_operand.vmem [shape: f32[1,32], index: 7, kind: input, shape index: {}]
  %s8 = inlined_call_operand.hbm [shape: f32[32,32], index: 8, kind: input, shape index: {}]
  %s9 = inlined_call_operand.vmem [shape: f32[1,32], index: 9, kind: input, shape index: {}]
  %s10 = inlined_call_operand.hbm [shape: f32[32,32], index: 10, kind: input, shape index: {}]
  %s11 = inlined_call_operand.vmem [shape: f32[1,32], index: 11, kind: input, shape index: {}]
  %s12 = inlined_call_operand.hbm [shape: f32[2,8,32], index: 12, kind: output, shape index: {0}]
  %s13 = inlined_call_operand.hbm [shape: f32[2,4,8,16], index: 13, kind: output, shape index: {1}]
  %14 = xla_tuple %s12, %s13
  %s15 = sld [smem:[#allocation0]]
  $region121: #{tpu_custom_call.1} parent=0
    _
  %s17 = ssub.s32 1, %s15
  %s18 = scalar_select 0, %s17, %s15
  $region1: #{tpu_custom_call.1} parent=0
    #allocation4 [shape = 'u8[8192]{0}', space=vmem, size = 0x2000, scoped, tag = 'input window, operand 0']
    #allocation5 [shape = 's32[2]{0}', space=sflag, size = 0x8, scoped, tag = 'scoped memory for tpu_custom_call.1']
    #allocation6 [shape = 's32[2]{0}', space=sflag, size = 0x8, scoped, tag = 'scoped memory for tpu_custom_call.1']
    #allocation7 [shape = 'u8[8192]{0}', space=vmem, size = 0x2000, scoped, tag = 'input window, operand 1']
    #allocation8 [shape = 's32[2]{0}', space=sflag, size = 0x8, scoped, tag = 'scoped memory for tpu_custom_call.1']
    #allocation9 [shape = 'u8[8192]{0}', space=vmem, size = 0x2000, scoped, tag = 'input window, operand 2']
    #allocation10 [shape = 'u8[16384]{0}', space=vmem, size = 0x4000, scoped, tag = 'input window, operand 4, single buffered']
    #allocation11 [shape = 's32[1]{0}', space=sflag, size = 0x4, scoped, tag = 'scoped memory for tpu_custom_call.1']
    #allocation12 [shape = 'u8[16384]{0}', space=vmem, size = 0x4000, scoped, tag = 'input window, operand 6, single buffered']
    #allocation13 [shape = 'u8[16384]{0}', space=vmem, size = 0x4000, scoped, tag = 'input window, operand 8, single buffered']
    #allocation14 [shape = 's32[1]{0}', space=sflag, size = 0x4, scoped, tag = 'scoped memory for tpu_custom_call.1']
    #allocation15 [shape = 'u8[16384]{0}', space=vmem, size = 0x4000, scoped, tag = 'input window, operand 10, single buffered']
    #allocation16 [shape = 'u8[8192]{0}', space=vmem, size = 0x2000, scoped, tag = 'output window, operand 0']
    #allocation17 [shape = 'u8[32768]{0}', space=vmem, size = 0x8000, scoped, tag = 'output window, operand 1']
    #allocation18 [shape = 's32[2]{0}', space=sflag, size = 0x8, scoped, tag = 'scoped memory for tpu_custom_call.1']
    %19 = vsyncpa [#allocation5], 0
    %s20 = scalar_lea.sflag [#allocation5], 1
    %21 = vsyncpa %s20, 0
    %22 = vsyncpa [#allocation8], 0
    %s23 = scalar_lea.sflag [#allocation8], 1
    %24 = vsyncpa %s23, 0
    %25 = vsyncpa [#allocation11], 0
    %26 = vsyncpa [#allocation14], 0
    %27 = vsyncpa [#allocation6], 0
    %s28 = scalar_lea.sflag [#allocation6], 1
    %29 = vsyncpa %s28, 0
    %30 = vsyncpa [#allocation18], 0
    %s31 = scalar_lea.sflag [#allocation18], 1
    %32 = vsyncpa %s31, 0
    loop: start=0, step=1, limit=4
    $region2: #{tpu_custom_call.1} parent=1 // loop_pre_header
      _
    $region3: #{tpu_custom_call.1} parent=1 // loop_header
      %s34 = sphi 0, %s38
      %p35 = scmp.ge.s32.totalorder %s34, 4
      %s41 = sphi 0, %s53
      %s42 = sphi 0, %s49
      %s43 = sphi 0, %s41
      %s44 = sphi 0, %s42
      %s45 = sphi 0, %s43
      %s46 = sphi 0, %s44
      %s58 = sphi 0, %s60
      %s61 = sphi 0, %s58
      %s62 = sphi 0, %s61
      %s78 = sphi 0, %s62
      %s84 = sphi 0, %s86
      %s87 = sphi 0, %s84
      %s88 = sphi 0, %s87
      %s104 = sphi 0, %s88
      %s110 = sphi 0, %s112
      %s113 = sphi 0, %s110
      %s114 = sphi 0, %s113
      %s130 = sphi 0, %s114
      %s136 = sphi 0, %s138
      %s139 = sphi 0, %s136
      %s140 = sphi 0, %s139
      %s156 = sphi 0, %s140
      %s160 = sphi 0, %s160
      %s162 = sphi 0, %s160
      %s163 = sphi 0, %s162
      %s177 = sphi 0, %s163
      %s181 = sphi 0, %s181
      %s183 = sphi 0, %s181
      %s184 = sphi 0, %s183
      %s198 = sphi 0, %s184
      %s202 = sphi 0, %s202
      %s204 = sphi 0, %s202
      %s205 = sphi 0, %s204
      %s219 = sphi 0, %s205
      %s223 = sphi 0, %s223
      %s225 = sphi 0, %s223
      %s226 = sphi 0, %s225
      %s240 = sphi 0, %s226
      %s244 = sphi 0, %s244
      %s246 = sphi 0, %s244
      %s247 = sphi 0, %s246
      %s261 = sphi 0, %s247
      %s265 = sphi 0, %s265
      %s267 = sphi 0, %s265
      %s268 = sphi 0, %s267
      %s282 = sphi 0, %s268
      %s286 = sphi 0, %s286
      %s288 = sphi 0, %s286
      %s289 = sphi 0, %s288
      %s303 = sphi 0, %s289
      %s307 = sphi 0, %s307
      %s309 = sphi 0, %s307
      %s310 = sphi 0, %s309
      %s324 = sphi 0, %s310
      %s332 = sphi 0, %s334
      %s335 = sphi 0, %s332
      %s336 = sphi 0, %s335
      %s352 = sphi 0, %s336
      %s358 = sphi 0, %s360
      %s361 = sphi 0, %s358
      %s362 = sphi 0, %s361
      %s378 = sphi 0, %s362
    $region4: #{tpu_custom_call.1} parent=1 // loop_header_branch
      %37 = sbr.rel (%p35) target = $region8
    $region5: #{tpu_custom_call.1} parent=1 // loop_body
      %s39 = ssub.s32 %s34, 1
      %s40 = ssub.s32 %s34, 2
      %s47 = sadd.s32 1, %s42
      %p48 = scmp.ge.s32.totalorder %s47, 1
      %s49 = scalar_select %p48, 0, %s47
      %s50 = sadd.s32 1, %s41
      %s51 = scalar_select %p48, %s50, %s41
      %p52 = scmp.ge.s32.totalorder %s51, 2
      %s53 = scalar_select %p52, 0, %s51
      %s54 = ssub.s32 %s41, %s53
      %s55 = ssub.s32 %s42, %s49
      %s56 = sor.u32 %s54, %s55
      %p57 = scmp.eq.s32.totalorder %s56, 0
      %s59 = sadd.s32 %s58, 1
      %s60 = scalar_select %p57, %s58, %s59
      %p63 = pneg %p57
      %p64 = scmp.eq.s32.totalorder %s34, 1
      %p65 = por %p63, %p64
      %p66 = scmp.ne.s32.totalorder %s58, %s61
      %p67 = scmp.eq.s32.totalorder %s34, 0
      %p68 = por %p66, %p67
      %p69 = scmp.ne.s32.totalorder %s58, %s61
      %p70 = scmp.eq.s32.totalorder %s39, 1
      %p71 = por %p69, %p70
      %p72 = scmp.ne.s32.totalorder %s61, %s62
      %p73 = scmp.eq.s32.totalorder %s39, 0
      %p74 = por %p72, %p73
      %p75 = scmp.ne.s32.totalorder %s61, %s62
      %p76 = scmp.eq.s32.totalorder %s40, 1
      %p77 = por %p75, %p76
      %p79 = scmp.ne.s32.totalorder %s62, %s78
      %p80 = scmp.eq.s32.totalorder %s40, 0
      %p81 = por %p79, %p80
      %s82 = ssub.s32 %s41, %s53
      %p83 = scmp.eq.s32.totalorder %s82, 0
      %s85 = sadd.s32 %s84, 1
      %s86 = scalar_select %p83, %s84, %s85
      %p89 = pneg %p83
      %p90 = scmp.eq.s32.totalorder %s34, 1
      %p91 = por %p89, %p90
      %p92 = scmp.ne.s32.totalorder %s84, %s87
      %p93 = scmp.eq.s32.totalorder %s34, 0
      %p94 = por %p92, %p93
      %p95 = scmp.ne.s32.totalorder %s84, %s87
      %p96 = scmp.eq.s32.totalorder %s39, 1
      %p97 = por %p95, %p96
      %p98 = scmp.ne.s32.totalorder %s87, %s88
      %p99 = scmp.eq.s32.totalorder %s39, 0
      %p100 = por %p98, %p99
      %p101 = scmp.ne.s32.totalorder %s87, %s88
      %p102 = scmp.eq.s32.totalorder %s40, 1
      %p103 = por %p101, %p102
      %p105 = scmp.ne.s32.totalorder %s88, %s104
      %p106 = scmp.eq.s32.totalorder %s40, 0
      %p107 = por %p105, %p106
      %s108 = ssub.s32 %s41, %s53
      %p109 = scmp.eq.s32.totalorder %s108, 0
      %s111 = sadd.s32 %s110, 1
      %s112 = scalar_select %p109, %s110, %s111
      %p115 = pneg %p109
      %p116 = scmp.eq.s32.totalorder %s34, 1
      %p117 = por %p115, %p116
      %p118 = scmp.ne.s32.totalorder %s110, %s113
      %p119 = scmp.eq.s32.totalorder %s34, 0
      %p120 = por %p118, %p119
      %p121 = scmp.ne.s32.totalorder %s110, %s113
      %p122 = scmp.eq.s32.totalorder %s39, 1
      %p123 = por %p121, %p122
      %p124 = scmp.ne.s32.totalorder %s113, %s114
      %p125 = scmp.eq.s32.totalorder %s39, 0
      %p126 = por %p124, %p125
      %p127 = scmp.ne.s32.totalorder %s113, %s114
      %p128 = scmp.eq.s32.totalorder %s40, 1
      %p129 = por %p127, %p128
      %p131 = scmp.ne.s32.totalorder %s114, %s130
      %p132 = scmp.eq.s32.totalorder %s40, 0
      %p133 = por %p131, %p132
      %s134 = ssub.s32 %s41, %s53
      %p135 = scmp.eq.s32.totalorder %s134, 0
      %s137 = sadd.s32 %s136, 1
      %s138 = scalar_select %p135, %s136, %s137
      %p141 = pneg %p135
      %p142 = scmp.eq.s32.totalorder %s34, 1
      %p143 = por %p141, %p142
      %p144 = scmp.ne.s32.totalorder %s136, %s139
      %p145 = scmp.eq.s32.totalorder %s34, 0
      %p146 = por %p144, %p145
      %p147 = scmp.ne.s32.totalorder %s136, %s139
      %p148 = scmp.eq.s32.totalorder %s39, 1
      %p149 = por %p147, %p148
      %p150 = scmp.ne.s32.totalorder %s139, %s140
      %p151 = scmp.eq.s32.totalorder %s39, 0
      %p152 = por %p150, %p151
      %p153 = scmp.ne.s32.totalorder %s139, %s140
      %p154 = scmp.eq.s32.totalorder %s40, 1
      %p155 = por %p153, %p154
      %p157 = scmp.ne.s32.totalorder %s140, %s156
      %p158 = scmp.eq.s32.totalorder %s40, 0
      %p159 = por %p157, %p158
      %s161 = sadd.s32 %s160, 1
      %p164 = scmp.eq.s32.totalorder %s34, 1
      %p165 = scmp.ne.s32.totalorder %s160, %s162
      %p166 = scmp.eq.s32.totalorder %s34, 0
      %p167 = por %p165, %p166
      %p168 = scmp.ne.s32.totalorder %s160, %s162
      %p169 = scmp.eq.s32.totalorder %s39, 1
      %p170 = por %p168, %p169
      %p171 = scmp.ne.s32.totalorder %s162, %s163
      %p172 = scmp.eq.s32.totalorder %s39, 0
      %p173 = por %p171, %p172
      %p174 = scmp.ne.s32.totalorder %s162, %s163
      %p175 = scmp.eq.s32.totalorder %s40, 1
      %p176 = por %p174, %p175
      %p178 = scmp.ne.s32.totalorder %s163, %s177
      %p179 = scmp.eq.s32.totalorder %s40, 0
      %p180 = por %p178, %p179
      %s182 = sadd.s32 %s181, 1
      %p185 = scmp.eq.s32.totalorder %s34, 1
      %p186 = scmp.ne.s32.totalorder %s181, %s183
      %p187 = scmp.eq.s32.totalorder %s34, 0
      %p188 = por %p186, %p187
      %p189 = scmp.ne.s32.totalorder %s181, %s183
      %p190 = scmp.eq.s32.totalorder %s39, 1
      %p191 = por %p189, %p190
      %p192 = scmp.ne.s32.totalorder %s183, %s184
      %p193 = scmp.eq.s32.totalorder %s39, 0
      %p194 = por %p192, %p193
      %p195 = scmp.ne.s32.totalorder %s183, %s184
      %p196 = scmp.eq.s32.totalorder %s40, 1
      %p197 = por %p195, %p196
      %p199 = scmp.ne.s32.totalorder %s184, %s198
      %p200 = scmp.eq.s32.totalorder %s40, 0
      %p201 = por %p199, %p200
      %s203 = sadd.s32 %s202, 1
      %p206 = scmp.eq.s32.totalorder %s34, 1
      %p207 = scmp.ne.s32.totalorder %s202, %s204
      %p208 = scmp.eq.s32.totalorder %s34, 0
      %p209 = por %p207, %p208
      %p210 = scmp.ne.s32.totalorder %s202, %s204
      %p211 = scmp.eq.s32.totalorder %s39, 1
      %p212 = por %p210, %p211
      %p213 = scmp.ne.s32.totalorder %s204, %s205
      %p214 = scmp.eq.s32.totalorder %s39, 0
      %p215 = por %p213, %p214
      %p216 = scmp.ne.s32.totalorder %s204, %s205
      %p217 = scmp.eq.s32.totalorder %s40, 1
      %p218 = por %p216, %p217
      %p220 = scmp.ne.s32.totalorder %s205, %s219
      %p221 = scmp.eq.s32.totalorder %s40, 0
      %p222 = por %p220, %p221
      %s224 = sadd.s32 %s223, 1
      %p227 = scmp.eq.s32.totalorder %s34, 1
      %p228 = scmp.ne.s32.totalorder %s223, %s225
      %p229 = scmp.eq.s32.totalorder %s34, 0
      %p230 = por %p228, %p229
      %p231 = scmp.ne.s32.totalorder %s223, %s225
      %p232 = scmp.eq.s32.totalorder %s39, 1
      %p233 = por %p231, %p232
      %p234 = scmp.ne.s32.totalorder %s225, %s226
      %p235 = scmp.eq.s32.totalorder %s39, 0
      %p236 = por %p234, %p235
      %p237 = scmp.ne.s32.totalorder %s225, %s226
      %p238 = scmp.eq.s32.totalorder %s40, 1
      %p239 = por %p237, %p238
      %p241 = scmp.ne.s32.totalorder %s226, %s240
      %p242 = scmp.eq.s32.totalorder %s40, 0
      %p243 = por %p241, %p242
      %s245 = sadd.s32 %s244, 1
      %p248 = scmp.eq.s32.totalorder %s34, 1
      %p249 = scmp.ne.s32.totalorder %s244, %s246
      %p250 = scmp.eq.s32.totalorder %s34, 0
      %p251 = por %p249, %p250
      %p252 = scmp.ne.s32.totalorder %s244, %s246
      %p253 = scmp.eq.s32.totalorder %s39, 1
      %p254 = por %p252, %p253
      %p255 = scmp.ne.s32.totalorder %s246, %s247
      %p256 = scmp.eq.s32.totalorder %s39, 0
      %p257 = por %p255, %p256
      %p258 = scmp.ne.s32.totalorder %s246, %s247
      %p259 = scmp.eq.s32.totalorder %s40, 1
      %p260 = por %p258, %p259
      %p262 = scmp.ne.s32.totalorder %s247, %s261
      %p263 = scmp.eq.s32.totalorder %s40, 0
      %p264 = por %p262, %p263
      %s266 = sadd.s32 %s265, 1
      %p269 = scmp.eq.s32.totalorder %s34, 1
      %p270 = scmp.ne.s32.totalorder %s265, %s267
      %p271 = scmp.eq.s32.totalorder %s34, 0
      %p272 = por %p270, %p271
      %p273 = scmp.ne.s32.totalorder %s265, %s267
      %p274 = scmp.eq.s32.totalorder %s39, 1
      %p275 = por %p273, %p274
      %p276 = scmp.ne.s32.totalorder %s267, %s268
      %p277 = scmp.eq.s32.totalorder %s39, 0
      %p278 = por %p276, %p277
      %p279 = scmp.ne.s32.totalorder %s267, %s268
      %p280 = scmp.eq.s32.totalorder %s40, 1
      %p281 = por %p279, %p280
      %p283 = scmp.ne.s32.totalorder %s268, %s282
      %p284 = scmp.eq.s32.totalorder %s40, 0
      %p285 = por %p283, %p284
      %s287 = sadd.s32 %s286, 1
      %p290 = scmp.eq.s32.totalorder %s34, 1
      %p291 = scmp.ne.s32.totalorder %s286, %s288
      %p292 = scmp.eq.s32.totalorder %s34, 0
      %p293 = por %p291, %p292
      %p294 = scmp.ne.s32.totalorder %s286, %s288
      %p295 = scmp.eq.s32.totalorder %s39, 1
      %p296 = por %p294, %p295
      %p297 = scmp.ne.s32.totalorder %s288, %s289
      %p298 = scmp.eq.s32.totalorder %s39, 0
      %p299 = por %p297, %p298
      %p300 = scmp.ne.s32.totalorder %s288, %s289
      %p301 = scmp.eq.s32.totalorder %s40, 1
      %p302 = por %p300, %p301
      %p304 = scmp.ne.s32.totalorder %s289, %s303
      %p305 = scmp.eq.s32.totalorder %s40, 0
      %p306 = por %p304, %p305
      %s308 = sadd.s32 %s307, 1
      %p311 = scmp.eq.s32.totalorder %s34, 1
      %p312 = scmp.ne.s32.totalorder %s307, %s309
      %p313 = scmp.eq.s32.totalorder %s34, 0
      %p314 = por %p312, %p313
      %p315 = scmp.ne.s32.totalorder %s307, %s309
      %p316 = scmp.eq.s32.totalorder %s39, 1
      %p317 = por %p315, %p316
      %p318 = scmp.ne.s32.totalorder %s309, %s310
      %p319 = scmp.eq.s32.totalorder %s39, 0
      %p320 = por %p318, %p319
      %p321 = scmp.ne.s32.totalorder %s309, %s310
      %p322 = scmp.eq.s32.totalorder %s40, 1
      %p323 = por %p321, %p322
      %p325 = scmp.ne.s32.totalorder %s310, %s324
      %p326 = scmp.eq.s32.totalorder %s40, 0
      %p327 = por %p325, %p326
      %s328 = ssub.s32 %s41, %s53
      %s329 = ssub.s32 %s42, %s49
      %s330 = sor.u32 %s328, %s329
      %p331 = scmp.eq.s32.totalorder %s330, 0
      %s333 = sadd.s32 %s332, 1
      %s334 = scalar_select %p331, %s332, %s333
      %p337 = pneg %p331
      %p338 = scmp.eq.s32.totalorder %s34, 1
      %p339 = por %p337, %p338
      %p340 = scmp.ne.s32.totalorder %s332, %s335
      %p341 = scmp.eq.s32.totalorder %s34, 0
      %p342 = por %p340, %p341
      %p343 = scmp.ne.s32.totalorder %s332, %s335
      %p344 = scmp.eq.s32.totalorder %s39, 1
      %p345 = por %p343, %p344
      %p346 = scmp.ne.s32.totalorder %s335, %s336
      %p347 = scmp.eq.s32.totalorder %s39, 0
      %p348 = por %p346, %p347
      %p349 = scmp.ne.s32.totalorder %s335, %s336
      %p350 = scmp.eq.s32.totalorder %s40, 1
      %p351 = por %p349, %p350
      %p353 = scmp.ne.s32.totalorder %s336, %s352
      %p354 = scmp.eq.s32.totalorder %s40, 0
      %p355 = por %p353, %p354
      %s356 = ssub.s32 %s41, %s53
      %p357 = scmp.eq.s32.totalorder %s356, 0
      %s359 = sadd.s32 %s358, 1
      %s360 = scalar_select %p357, %s358, %s359
      %p363 = pneg %p357
      %p364 = scmp.eq.s32.totalorder %s34, 1
      %p365 = por %p363, %p364
      %p366 = scmp.ne.s32.totalorder %s358, %s361
      %p367 = scmp.eq.s32.totalorder %s34, 0
      %p368 = por %p366, %p367
      %p369 = scmp.ne.s32.totalorder %s358, %s361
      %p370 = scmp.eq.s32.totalorder %s39, 1
      %p371 = por %p369, %p370
      %p372 = scmp.ne.s32.totalorder %s361, %s362
      %p373 = scmp.eq.s32.totalorder %s39, 0
      %p374 = por %p372, %p373
      %p375 = scmp.ne.s32.totalorder %s361, %s362
      %p376 = scmp.eq.s32.totalorder %s40, 1
      %p377 = por %p375, %p376
      %p379 = scmp.ne.s32.totalorder %s362, %s378
      %p380 = scmp.eq.s32.totalorder %s40, 0
      %p381 = por %p379, %p380
      %p382 = scmp.le.s32.totalorder 1, %s34
      %p383 = scmp.lt.s32.totalorder %s34, 3
      %p384 = pnand %p382, %p383
      %p385 = pneg %p384
      // Predicated region
      $region9: #{tpu_custom_call.1} parent=5 // pred_check
        _
      $region10: #{tpu_custom_call.1} parent=5 // pred_check_branch
        %387 = sbr.rel (%p384) target = $region12
      $region11: #{tpu_custom_call.1} parent=5 // pred_region
        %s388 = ssub.s32 %s34, 1
        // Predicated region
        $region13: #{tpu_custom_call.1} parent=11 // pred_check
          %p389 = pneg %p173
        $region14: #{tpu_custom_call.1} parent=11 // pred_check_branch
          %391 = sbr.rel (%p389) target = $region16
        $region15: #{tpu_custom_call.1} parent=11 // pred_region
          %s393 = ssub.s32 512, 512
          %394 = vsyncadd [#allocation11], %s393
          %s395 = sshll.u32 [#allocation10], 4
          %s396 = int_to_ptr.vmem [resolvable:$true] %s395
          %401 = dma.hbm_to_vmem [thread:$0]  %s4, 512, %s396, [#allocation11], 128, 128, 8
        $region16: #{tpu_custom_call.1} parent=11 // pred_fallthru
          _
        // Predicated region
        $region17: #{tpu_custom_call.1} parent=11 // pred_check
          %p402 = pneg %p194
        $region18: #{tpu_custom_call.1} parent=11 // pred_check_branch
          %404 = sbr.rel (%p402) target = $region20
        $region19: #{tpu_custom_call.1} parent=11 // pred_region
          _
        $region20: #{tpu_custom_call.1} parent=11 // pred_fallthru
          _
        // Predicated region
        $region21: #{tpu_custom_call.1} parent=11 // pred_check
          %p405 = pneg %p215
        $region22: #{tpu_custom_call.1} parent=11 // pred_check_branch
          %407 = sbr.rel (%p405) target = $region24
        $region23: #{tpu_custom_call.1} parent=11 // pred_region
          %s409 = ssub.s32 512, 512
          %410 = vsyncadd [#allocation11], %s409
          %s411 = sshll.u32 [#allocation12], 4
          %s412 = int_to_ptr.vmem [resolvable:$true] %s411
          %417 = dma.hbm_to_vmem [thread:$0]  %s6, 512, %s412, [#allocation11], 128, 128, 8
        $region24: #{tpu_custom_call.1} parent=11 // pred_fallthru
          _
        // Predicated region
        $region25: #{tpu_custom_call.1} parent=11 // pred_check
          %p418 = pneg %p236
        $region26: #{tpu_custom_call.1} parent=11 // pred_check_branch
          %420 = sbr.rel (%p418) target = $region28
        $region27: #{tpu_custom_call.1} parent=11 // pred_region
          _
        $region28: #{tpu_custom_call.1} parent=11 // pred_fallthru
          _
        // Predicated region
        $region29: #{tpu_custom_call.1} parent=11 // pred_check
          %p421 = pneg %p257
        $region30: #{tpu_custom_call.1} parent=11 // pred_check_branch
          %423 = sbr.rel (%p421) target = $region32
        $region31: #{tpu_custom_call.1} parent=11 // pred_region
          %s425 = ssub.s32 512, 512
          %426 = vsyncadd [#allocation14], %s425
          %s427 = sshll.u32 [#allocation13], 4
          %s428 = int_to_ptr.vmem [resolvable:$true] %s427
          %433 = dma.hbm_to_vmem [thread:$0]  %s8, 512, %s428, [#allocation14], 128, 128, 8
        $region32: #{tpu_custom_call.1} parent=11 // pred_fallthru
          _
        // Predicated region
        $region33: #{tpu_custom_call.1} parent=11 // pred_check
          %p434 = pneg %p278
        $region34: #{tpu_custom_call.1} parent=11 // pred_check_branch
          %436 = sbr.rel (%p434) target = $region36
        $region35: #{tpu_custom_call.1} parent=11 // pred_region
          _
        $region36: #{tpu_custom_call.1} parent=11 // pred_fallthru
          _
        // Predicated region
        $region37: #{tpu_custom_call.1} parent=11 // pred_check
          %p437 = pneg %p299
        $region38: #{tpu_custom_call.1} parent=11 // pred_check_branch
          %439 = sbr.rel (%p437) target = $region40
        $region39: #{tpu_custom_call.1} parent=11 // pred_region
          %s441 = ssub.s32 512, 512
          %442 = vsyncadd [#allocation14], %s441
          %s443 = sshll.u32 [#allocation15], 4
          %s444 = int_to_ptr.vmem [resolvable:$true] %s443
          %449 = dma.hbm_to_vmem [thread:$0]  %s10, 512, %s444, [#allocation14], 128, 128, 8
        $region40: #{tpu_custom_call.1} parent=11 // pred_fallthru
          _
        // Predicated region
        $region41: #{tpu_custom_call.1} parent=11 // pred_check
          %p450 = pneg %p320
        $region42: #{tpu_custom_call.1} parent=11 // pred_check_branch
          %452 = sbr.rel (%p450) target = $region44
        $region43: #{tpu_custom_call.1} parent=11 // pred_region
          _
        $region44: #{tpu_custom_call.1} parent=11 // pred_fallthru
          _
      $region12: #{tpu_custom_call.1} parent=5 // pred_fallthru
        _
      %p453 = scmp.lt.s32.totalorder %s34, 2
      // Predicated region
      $region45: #{tpu_custom_call.1} parent=5 // pred_check
        %p454 = pneg %p453
      $region46: #{tpu_custom_call.1} parent=5 // pred_check_branch
        %456 = sbr.rel (%p454) target = $region48
      $region47: #{tpu_custom_call.1} parent=5 // pred_region
        // Predicated region
        $region49: #{tpu_custom_call.1} parent=47 // pred_check
          %p457 = pneg %p68
        $region50: #{tpu_custom_call.1} parent=47 // pred_check_branch
          %459 = sbr.rel (%p457) target = $region52
        $region51: #{tpu_custom_call.1} parent=47 // pred_region
          %s460 = sand.u32 %s58, 1
          %s461 = scalar_lea.sflag [#allocation5], %s460
          %s462 = sand.u32 %s58, 1
          %s463 = smul.addr %s462, 8
          %s464 = scalar_lea.vmem [#allocation4], %s463
          %s466 = ssub.s32 128, 128
          %467 = vsyncadd %s461, %s466
          %s468 = sadd.s32 %s42, %s41
          %s469 = smul.addr %s468, 128
          %s470 = scalar_lea.hbm %s0, %s469
          %s472 = sshll.u32 %s464, 4
          %s473 = int_to_ptr.vmem [resolvable:$true] %s472
          %475 = dma.hbm_to_vmem [thread:$0]  %s470, 128, %s473, %s461
        $region52: #{tpu_custom_call.1} parent=47 // pred_fallthru
          _
        // Predicated region
        $region53: #{tpu_custom_call.1} parent=47 // pred_check
          %p476 = pneg %p94
        $region54: #{tpu_custom_call.1} parent=47 // pred_check_branch
          %478 = sbr.rel (%p476) target = $region56
        $region55: #{tpu_custom_call.1} parent=47 // pred_region
          %s479 = sand.u32 %s34, 1
          %s480 = scalar_lea.sflag [#allocation8], %s479
          %s481 = sand.u32 %s84, 1
          %s482 = smul.addr %s481, 8
          %s483 = scalar_lea.vmem [#allocation7], %s482
          %s485 = ssub.s32 128, 128
          %486 = vsyncadd %s480, %s485
          %s487 = smul.addr %s41, 128
          %s488 = scalar_lea.hbm %s1, %s487
          %s490 = sshll.u32 %s483, 4
          %s491 = int_to_ptr.vmem [resolvable:$true] %s490
          %493 = dma.hbm_to_vmem [thread:$0]  %s488, 128, %s491, %s480
        $region56: #{tpu_custom_call.1} parent=47 // pred_fallthru
          _
        // Predicated region
        $region57: #{tpu_custom_call.1} parent=47 // pred_check
          %p494 = pneg %p120
        $region58: #{tpu_custom_call.1} parent=47 // pred_check_branch
          %496 = sbr.rel (%p494) target = $region60
        $region59: #{tpu_custom_call.1} parent=47 // pred_region
          %s497 = sand.u32 %s34, 1
          %s498 = scalar_lea.sflag [#allocation8], %s497
          %s499 = sand.u32 %s110, 1
          %s500 = smul.addr %s499, 8
          %s501 = scalar_lea.vmem [#allocation9], %s500
          %s503 = ssub.s32 128, 128
          %504 = vsyncadd %s498, %s503
          %s505 = smul.addr %s41, 128
          %s506 = scalar_lea.hbm %s2, %s505
          %s508 = sshll.u32 %s501, 4
          %s509 = int_to_ptr.vmem [resolvable:$true] %s508
          %511 = dma.hbm_to_vmem [thread:$0]  %s506, 128, %s509, %s498
        $region60: #{tpu_custom_call.1} parent=47 // pred_fallthru
          _
        // Predicated region
        $region61: #{tpu_custom_call.1} parent=47 // pred_check
          %p512 = pneg %p146
        $region62: #{tpu_custom_call.1} parent=47 // pred_check_branch
          %514 = sbr.rel (%p512) target = $region64
        $region63: #{tpu_custom_call.1} parent=47 // pred_region
          %p515 = scmp.lt.s32.totalorder %s41, 1
          %s516 = scalar_select %p515, %s41, 1
          %s517 = scalar_lea.vmem %s3, %s516
        $region64: #{tpu_custom_call.1} parent=47 // pred_fallthru
          _
      $region48: #{tpu_custom_call.1} parent=5 // pred_fallthru
        _
      %p518 = scmp.le.s32.totalorder 1, %s34
      %p519 = scmp.lt.s32.totalorder %s34, 3
      %p520 = pnand %p518, %p519
      %p521 = pneg %p520
      // Predicated region
      $region65: #{tpu_custom_call.1} parent=5 // pred_check
        _
      $region66: #{tpu_custom_call.1} parent=5 // pred_check_branch
        %523 = sbr.rel (%p520) target = $region68
      $region67: #{tpu_custom_call.1} parent=5 // pred_region
        %s524 = ssub.s32 %s34, 1
        %s525 = sand.u32 %s61, 1
        %s526 = scalar_lea.sflag [#allocation5], %s525
        %s527 = sand.u32 %s61, 1
        %s528 = smul.addr %s527, 8
        %s529 = scalar_lea.vmem [#allocation4], %s528
        // Predicated region
        $region69: #{tpu_custom_call.1} parent=67 // pred_check
          %p530 = pneg %p74
        $region70: #{tpu_custom_call.1} parent=67 // pred_check_branch
          %532 = sbr.rel (%p530) target = $region72
        $region71: #{tpu_custom_call.1} parent=67 // pred_region
          %533 = dma.done %s526, 128
        $region72: #{tpu_custom_call.1} parent=67 // pred_fallthru
          _
        %s534 = sand.u32 %s39, 1
        %s535 = scalar_lea.sflag [#allocation8], %s534
        %s536 = sand.u32 %s87, 1
        %s537 = smul.addr %s536, 8
        %s538 = scalar_lea.vmem [#allocation7], %s537
        // Predicated region
        $region73: #{tpu_custom_call.1} parent=67 // pred_check
          %p539 = pneg %p100
        $region74: #{tpu_custom_call.1} parent=67 // pred_check_branch
          %541 = sbr.rel (%p539) target = $region76
        $region75: #{tpu_custom_call.1} parent=67 // pred_region
          %542 = dma.done %s535, 128
        $region76: #{tpu_custom_call.1} parent=67 // pred_fallthru
          _
        %s543 = sand.u32 %s39, 1
        %s544 = scalar_lea.sflag [#allocation8], %s543
        %s545 = sand.u32 %s113, 1
        %s546 = smul.addr %s545, 8
        %s547 = scalar_lea.vmem [#allocation9], %s546
        // Predicated region
        $region77: #{tpu_custom_call.1} parent=67 // pred_check
          %p548 = pneg %p126
        $region78: #{tpu_custom_call.1} parent=67 // pred_check_branch
          %550 = sbr.rel (%p548) target = $region80
        $region79: #{tpu_custom_call.1} parent=67 // pred_region
          %551 = dma.done %s544, 128
        $region80: #{tpu_custom_call.1} parent=67 // pred_fallthru
          _
        // Predicated region
        $region81: #{tpu_custom_call.1} parent=67 // pred_check
          %p552 = pneg %p173
        $region82: #{tpu_custom_call.1} parent=67 // pred_check_branch
          %554 = sbr.rel (%p552) target = $region84
        $region83: #{tpu_custom_call.1} parent=67 // pred_region
          %555 = dma.done [#allocation11], 512
        $region84: #{tpu_custom_call.1} parent=67 // pred_fallthru
          _
        // Predicated region
        $region85: #{tpu_custom_call.1} parent=67 // pred_check
          %p556 = pneg %p215
        $region86: #{tpu_custom_call.1} parent=67 // pred_check_branch
          %558 = sbr.rel (%p556) target = $region88
        $region87: #{tpu_custom_call.1} parent=67 // pred_region
          %559 = dma.done [#allocation11], 512
        $region88: #{tpu_custom_call.1} parent=67 // pred_fallthru
          _
        // Predicated region
        $region89: #{tpu_custom_call.1} parent=67 // pred_check
          %p560 = pneg %p257
        $region90: #{tpu_custom_call.1} parent=67 // pred_check_branch
          %562 = sbr.rel (%p560) target = $region92
        $region91: #{tpu_custom_call.1} parent=67 // pred_region
          %563 = dma.done [#allocation14], 512
        $region92: #{tpu_custom_call.1} parent=67 // pred_fallthru
          _
        // Predicated region
        $region93: #{tpu_custom_call.1} parent=67 // pred_check
          %p564 = pneg %p299
        $region94: #{tpu_custom_call.1} parent=67 // pred_check_branch
          %566 = sbr.rel (%p564) target = $region96
        $region95: #{tpu_custom_call.1} parent=67 // pred_region
          %567 = dma.done [#allocation14], 512
        $region96: #{tpu_custom_call.1} parent=67 // pred_fallthru
          _
        %s568 = sand.u32 %s61, 1
        %s569 = scalar_lea.sflag [#allocation5], %s568
        %s570 = sand.u32 %s61, 1
        %s571 = smul.addr %s570, 8
        %s572 = scalar_lea.vmem [#allocation4], %s571
        %p573 = pneg %p74
        %p574 = pneg %p71
        %s575 = sand.u32 %s39, 1
        %s576 = scalar_lea.sflag [#allocation8], %s575
        %s577 = sand.u32 %s87, 1
        %s578 = smul.addr %s577, 8
        %s579 = scalar_lea.vmem [#allocation7], %s578
        %p580 = pneg %p100
        %p581 = pneg %p97
        %s582 = sand.u32 %s39, 1
        %s583 = scalar_lea.sflag [#allocation8], %s582
        %s584 = sand.u32 %s113, 1
        %s585 = smul.addr %s584, 8
        %s586 = scalar_lea.vmem [#allocation9], %s585
        %p587 = pneg %p126
        %p588 = pneg %p123
        %p589 = scmp.lt.s32.totalorder %s43, 1
        %s590 = scalar_select %p589, %s43, 1
        %s591 = scalar_lea.vmem %s3, %s590
        %p592 = pneg %p152
        %p593 = pneg %p149
        %p594 = pneg %p173
        %p595 = pneg %p170
        %p596 = pneg %p194
        %p597 = pneg %p191
        %p598 = pneg %p215
        %p599 = pneg %p212
        %p600 = pneg %p236
        %p601 = pneg %p233
        %p602 = pneg %p257
        %p603 = pneg %p254
        %p604 = pneg %p278
        %p605 = pneg %p275
        %p606 = pneg %p299
        %p607 = pneg %p296
        %p608 = pneg %p320
        %p609 = pneg %p317
        %p610 = pneg %p348
        %p611 = pneg %p345
        %s612 = sand.u32 %s335, 1
        %s613 = scalar_lea.sflag [#allocation6], %s612
        %s614 = sand.u32 %s335, 1
        %s615 = smul.addr %s614, 8
        %s616 = scalar_lea.vmem [#allocation16], %s615
        %p617 = pneg %p374
        %p618 = pneg %p371
        %s619 = sand.u32 %s361, 1
        %s620 = scalar_lea.sflag [#allocation18], %s619
        %s621 = sand.u32 %s361, 1
        %s622 = smul.addr %s621, 32
        %s623 = scalar_lea.vmem [#allocation17], %s622
        %p624 = scmp.lt.s32.totalorder %s43, 1
        %s625 = scalar_select %p624, %s43, 1
        %s626 = scalar_lea.vmem %s3, %s625
        %p627 = scmp.eq.s32.totalorder %s44, 0
        // Predicated region
        $region97: #{tpu_custom_call.1} parent=67 // pred_check
          %p628 = pneg %p627
        $region98: #{tpu_custom_call.1} parent=67 // pred_check_branch
          %630 = sbr.rel (%p628) target = $region100
        $region99: #{tpu_custom_call.1} parent=67 // pred_region
          %v631 = vld [vmem:[%s538] sm:$0xff]
          %v632 = vld [vmem:[%s547] sm:$0xff]
          %v633 = vld [vmem:[#allocation12] sm:$0xff]
          %v634 = vld [vmem:[#allocation12 + $0x8] sm:$0xff]
          %v635 = vld [vmem:[#allocation12 + $0x10] sm:$0xff]
          %v636 = vld [vmem:[#allocation12 + $0x18] sm:$0xff]
          %v637 = vld [vmem:[%s7] sm:$0x1]
          %v639 = vlaneseq
          %v640 = vshrl.u32 %v639, 7
          %v641 = vsub.s32 0, %v640
          %v642 = vrot.slane %v637, %v641
          %vm644 = vcmask 261120
          %v646 = vsel %vm644, %v631, 0
          %648 = vmatprep.subr.mxu0 0.0
          %649 = vmatpush1.msra.mxu0 0.0
          %650 = vmatprep.subr.mxu0 0.0
          %651 = vmatpush1.msra.mxu0 0.0
          %652 = vmatprep.subr.mxu0 0.0
          %653 = vmatpush1.msra.mxu0 0.0
          %654 = vmatprep.subr.mxu0 0.0
          %655 = vmatpush1.msra.mxu0 0.0
          %656 = vmatprep.subr.mxu0 0.0
          %657 = vmatpush1.msra.mxu0 0.0
          %658 = vmatprep.subr.mxu0 0.0
          %659 = vmatpush1.msra.mxu0 0.0
          %660 = vmatprep.subr.mxu0 0.0
          %661 = vmatpush1.msra.mxu0 0.0
          %662 = vmatprep.subr.mxu0 0.0
          %663 = vmatpush1.msra.mxu0 0.0
          %664 = vmatprep.subr.mxu0 0.0
          %665 = vmatpush1.msra.mxu0 0.0
          %666 = vmatprep.subr.mxu0 0.0
          %667 = vmatpush1.msra.mxu0 0.0
          %668 = vmatprep.subr.mxu0 0.0
          %669 = vmatpush1.msra.mxu0 0.0
          %670 = vmatprep.subr.mxu0 0.0
          %671 = vmatpush1.msra.mxu0 0.0
          %672 = vmatprep.subr.mxu0 0.0
          %673 = vmatpush1.msra.mxu0 %v636
          %674 = vmatprep.subr.mxu0 0.0
          %675 = vmatpush1.msra.mxu0 %v635
          %676 = vmatprep.subr.mxu0 0.0
          %677 = vmatpush1.msra.mxu0 %v634
          %678 = vmatprep.subr.mxu0 0.0
          %679 = vmatpush1.msra.mxu0 %v633
          %680 = vmatprep.subr.mxu0 0.0
          %681 = vmatpush2.msra.mxu0 0.0
          %682 = vmatprep.subr.mxu0 0.0
          %683 = vmatpush2.msra.mxu0 0.0
          %684 = vmatprep.subr.mxu0 0.0
          %685 = vmatpush2.msra.mxu0 0.0
          %686 = vmatprep.subr.mxu0 0.0
          %687 = vmatpush2.msra.mxu0 0.0
          %688 = vmatprep.subr.mxu0 0.0
          %689 = vmatpush2.msra.mxu0 0.0
          %690 = vmatprep.subr.mxu0 0.0
          %691 = vmatpush2.msra.mxu0 0.0
          %692 = vmatprep.subr.mxu0 0.0
          %693 = vmatpush2.msra.mxu0 0.0
          %694 = vmatprep.subr.mxu0 0.0
          %695 = vmatpush2.msra.mxu0 0.0
          %696 = vmatprep.subr.mxu0 0.0
          %697 = vmatpush2.msra.mxu0 0.0
          %698 = vmatprep.subr.mxu0 0.0
          %699 = vmatpush2.msra.mxu0 0.0
          %700 = vmatprep.subr.mxu0 0.0
          %701 = vmatpush2.msra.mxu0 0.0
          %702 = vmatprep.subr.mxu0 0.0
          %703 = vmatpush2.msra.mxu0 0.0
          %704 = vmatprep.subr.mxu0 0.0
          %705 = vmatpush2.msra.mxu0 0.0
          %706 = vmatprep.subr.mxu0 0.0
          %707 = vmatpush2.msra.mxu0 0.0
          %708 = vmatprep.subr.mxu0 0.0
          %709 = vmatpush2.msra.mxu0 0.0
          %710 = vmatprep.subr.mxu0 0.0
          %711 = vmatpush2.msra.mxu0 0.0
          %712 = vmatprep.mubr.f32.mxu0 0.0
          %713 = vmatmul.mubr.f32.gmra.mxu0 %v646
          %v714 = vpop.f32.mrf.mxu0
          %v715 = vadd.f32 %v642, %v714
          %v716 = vpop.f32.mrf.mxu0
          %717 = vdwg.mxu0
          %v718 = vld [vmem:[#allocation13] sm:$0xff]
          %v719 = vld [vmem:[#allocation13 + $0x8] sm:$0xff]
          %v720 = vld [vmem:[#allocation13 + $0x10] sm:$0xff]
          %v721 = vld [vmem:[#allocation13 + $0x18] sm:$0xff]
          %v722 = vld [vmem:[%s9] sm:$0x1]
          %v724 = vlaneseq
          %v725 = vshrl.u32 %v724, 7
          %v726 = vsub.s32 0, %v725
          %v727 = vrot.slane %v722, %v726
          %v730 = vsel %vm644, %v632, 0
          %732 = vmatprep.subr.mxu0 0.0
          %733 = vmatpush1.msra.mxu0 0.0
          %734 = vmatprep.subr.mxu0 0.0
          %735 = vmatpush1.msra.mxu0 0.0
          %736 = vmatprep.subr.mxu0 0.0
          %737 = vmatpush1.msra.mxu0 0.0
          %738 = vmatprep.subr.mxu0 0.0
          %739 = vmatpush1.msra.mxu0 0.0
          %740 = vmatprep.subr.mxu0 0.0
          %741 = vmatpush1.msra.mxu0 0.0
          %742 = vmatprep.subr.mxu0 0.0
          %743 = vmatpush1.msra.mxu0 0.0
          %744 = vmatprep.subr.mxu0 0.0
          %745 = vmatpush1.msra.mxu0 0.0
          %746 = vmatprep.subr.mxu0 0.0
          %747 = vmatpush1.msra.mxu0 0.0
          %748 = vmatprep.subr.mxu0 0.0
          %749 = vmatpush1.msra.mxu0 0.0
          %750 = vmatprep.subr.mxu0 0.0
          %751 = vmatpush1.msra.mxu0 0.0
          %752 = vmatprep.subr.mxu0 0.0
          %753 = vmatpush1.msra.mxu0 0.0
          %754 = vmatprep.subr.mxu0 0.0
          %755 = vmatpush1.msra.mxu0 0.0
          %756 = vmatprep.subr.mxu0 0.0
          %757 = vmatpush1.msra.mxu0 %v721
          %758 = vmatprep.subr.mxu0 0.0
          %759 = vmatpush1.msra.mxu0 %v720
          %760 = vmatprep.subr.mxu0 0.0
          %761 = vmatpush1.msra.mxu0 %v719
          %762 = vmatprep.subr.mxu0 0.0
          %763 = vmatpush1.msra.mxu0 %v718
          %764 = vmatprep.subr.mxu0 0.0
          %765 = vmatpush2.msra.mxu0 0.0
          %766 = vmatprep.subr.mxu0 0.0
          %767 = vmatpush2.msra.mxu0 0.0
          %768 = vmatprep.subr.mxu0 0.0
          %769 = vmatpush2.msra.mxu0 0.0
          %770 = vmatprep.subr.mxu0 0.0
          %771 = vmatpush2.msra.mxu0 0.0
          %772 = vmatprep.subr.mxu0 0.0
          %773 = vmatpush2.msra.mxu0 0.0
          %774 = vmatprep.subr.mxu0 0.0
          %775 = vmatpush2.msra.mxu0 0.0
          %776 = vmatprep.subr.mxu0 0.0
          %777 = vmatpush2.msra.mxu0 0.0
          %778 = vmatprep.subr.mxu0 0.0
          %779 = vmatpush2.msra.mxu0 0.0
          %780 = vmatprep.subr.mxu0 0.0
          %781 = vmatpush2.msra.mxu0 0.0
          %782 = vmatprep.subr.mxu0 0.0
          %783 = vmatpush2.msra.mxu0 0.0
          %784 = vmatprep.subr.mxu0 0.0
          %785 = vmatpush2.msra.mxu0 0.0
          %786 = vmatprep.subr.mxu0 0.0
          %787 = vmatpush2.msra.mxu0 0.0
          %788 = vmatprep.subr.mxu0 0.0
          %789 = vmatpush2.msra.mxu0 0.0
          %790 = vmatprep.subr.mxu0 0.0
          %791 = vmatpush2.msra.mxu0 0.0
          %792 = vmatprep.subr.mxu0 0.0
          %793 = vmatpush2.msra.mxu0 0.0
          %794 = vmatprep.subr.mxu0 0.0
          %795 = vmatpush2.msra.mxu0 0.0
          %796 = vmatprep.mubr.f32.mxu0 0.0
          %797 = vmatmul.mubr.f32.gmra.mxu0 %v730
          %v798 = vpop.f32.mrf.mxu0
          %v799 = vadd.f32 %v727, %v798
          %v800 = vpop.f32.mrf.mxu0
          %801 = vdwg.mxu0
          %803 = vrot.lane.b32.xlu0 %v715, 120
          %v804 = vpop.permute.xlu0 %803
          %806 = vrot.lane.b32.xlu0 %v715, 112
          %v807 = vpop.permute.xlu0 %806
          %809 = vrot.lane.b32.xlu0 %v715, 104
          %v810 = vpop.permute.xlu0 %809
          %v812 = vcombine.low %v715, %v807
          %v813 = vcombine.high %v715, %v807
          %v815 = vunpack.c.l.s4 1983009808
          %v816 = vunpack.c.0.s8 %v815
          %v817 = vlaneseq
          %v818 = vshrl.u32 %v817, 7
          %v819 = vsub.s32 %v816, %v818
          %v820 = vrot.slane %v812, %v819
          %v822 = vunpack.c.l.s4 1983009808
          %v823 = vunpack.c.0.s8 %v822
          %v824 = vlaneseq
          %v825 = vshrl.u32 %v824, 7
          %v826 = vsub.s32 %v823, %v825
          %v827 = vrot.slane %v813, %v826
          %v828 = vcombine.low %v804, %v810
          %v829 = vcombine.high %v804, %v810
          %v831 = vunpack.c.l.s4 1983009808
          %v832 = vunpack.c.0.s8 %v831
          %v833 = vlaneseq
          %v834 = vshrl.u32 %v833, 7
          %v835 = vsub.s32 %v832, %v834
          %v836 = vrot.slane %v828, %v835
          %v838 = vunpack.c.l.s4 1983009808
          %v839 = vunpack.c.0.s8 %v838
          %v840 = vlaneseq
          %v841 = vshrl.u32 %v840, 7
          %v842 = vsub.s32 %v839, %v841
          %v843 = vrot.slane %v829, %v842
          %v844 = vcombine.low %v820, %v836
          %v845 = vcombine.high %v820, %v836
          %v847 = vunpack.c.l.s4 1934713408
          %v848 = vunpack.c.0.s8 %v847
          %v849 = vlaneseq
          %v850 = vshrl.u32 %v849, 7
          %v851 = vsub.s32 %v848, %v850
          %v852 = vrot.slane %v844, %v851
          %v854 = vunpack.c.l.s4 1934713408
          %v855 = vunpack.c.0.s8 %v854
          %v856 = vlaneseq
          %v857 = vshrl.u32 %v856, 7
          %v858 = vsub.s32 %v855, %v857
          %v859 = vrot.slane %v845, %v858
          %v860 = vcombine.low %v827, %v843
          %v861 = vcombine.high %v827, %v843
          %v863 = vunpack.c.l.s4 1934713408
          %v864 = vunpack.c.0.s8 %v863
          %v865 = vlaneseq
          %v866 = vshrl.u32 %v865, 7
          %v867 = vsub.s32 %v864, %v866
          %v868 = vrot.slane %v860, %v867
          %v870 = vunpack.c.l.s4 1934713408
          %v871 = vunpack.c.0.s8 %v870
          %v872 = vlaneseq
          %v873 = vshrl.u32 %v872, 7
          %v874 = vsub.s32 %v871, %v873
          %v875 = vrot.slane %v861, %v874
          %v876 = vcombine.high %v852, 0.0
          %v877 = vcombine.high %v859, 0.0
          %v878 = vcombine.high %v868, 0.0
          %v879 = vcombine.high %v875, 0.0
          %v880 = vcombine.low %v852, %v859
          %v882 = vunpack.c.l.s4 1983009808
          %v883 = vunpack.c.0.s8 %v882
          %v884 = vlaneseq
          %v885 = vshrl.u32 %v884, 7
          %v886 = vsub.s32 %v883, %v885
          %v887 = vrot.slane %v880, %v886
          %v888 = vcombine.low %v876, %v877
          %v890 = vunpack.c.l.s4 1983009808
          %v891 = vunpack.c.0.s8 %v890
          %v892 = vlaneseq
          %v893 = vshrl.u32 %v892, 7
          %v894 = vsub.s32 %v891, %v893
          %v895 = vrot.slane %v888, %v894
          %v896 = vcombine.low %v868, %v875
          %v898 = vunpack.c.l.s4 1983009808
          %v899 = vunpack.c.0.s8 %v898
          %v900 = vlaneseq
          %v901 = vshrl.u32 %v900, 7
          %v902 = vsub.s32 %v899, %v901
          %v903 = vrot.slane %v896, %v902
          %v904 = vcombine.low %v878, %v879
          %v906 = vunpack.c.l.s4 1983009808
          %v907 = vunpack.c.0.s8 %v906
          %v908 = vlaneseq
          %v909 = vshrl.u32 %v908, 7
          %v910 = vsub.s32 %v907, %v909
          %v911 = vrot.slane %v904, %v910
          %v912 = vcombine.low %v887, %v895
          %v913 = vcombine.high %v887, %v895
          %v915 = vunpack.c.l.s4 1934713408
          %v916 = vunpack.c.0.s8 %v915
          %v917 = vlaneseq
          %v918 = vshrl.u32 %v917, 7
          %v919 = vsub.s32 %v916, %v918
          %v920 = vrot.slane %v912, %v919
          %v922 = vunpack.c.l.s4 1934713408
          %v923 = vunpack.c.0.s8 %v922
          %v924 = vlaneseq
          %v925 = vshrl.u32 %v924, 7
          %v926 = vsub.s32 %v923, %v925
          %v927 = vrot.slane %v913, %v926
          %v928 = vcombine.low %v903, %v911
          %v929 = vcombine.high %v903, %v911
          %v931 = vunpack.c.l.s4 1934713408
          %v932 = vunpack.c.0.s8 %v931
          %v933 = vlaneseq
          %v934 = vshrl.u32 %v933, 7
          %v935 = vsub.s32 %v932, %v934
          %v936 = vrot.slane %v928, %v935
          %v938 = vunpack.c.l.s4 1934713408
          %v939 = vunpack.c.0.s8 %v938
          %v940 = vlaneseq
          %v941 = vshrl.u32 %v940, 7
          %v942 = vsub.s32 %v939, %v941
          %v943 = vrot.slane %v929, %v942
          %v944 = vcombine.low %v920, %v936
          %v945 = vcombine.high %v920, %v936
          %v946 = vcombine.low %v927, %v943
          %v947 = vcombine.high %v927, %v943
          %949 = vrot.lane.b32.xlu0 %v799, 120
          %v950 = vpop.permute.xlu0 %949
          %952 = vrot.lane.b32.xlu0 %v799, 112
          %v953 = vpop.permute.xlu0 %952
          %955 = vrot.lane.b32.xlu0 %v799, 104
          %v956 = vpop.permute.xlu0 %955
          %v958 = vcombine.low %v799, %v953
          %v959 = vcombine.high %v799, %v953
          %v961 = vunpack.c.l.s4 1983009808
          %v962 = vunpack.c.0.s8 %v961
          %v963 = vlaneseq
          %v964 = vshrl.u32 %v963, 7
          %v965 = vsub.s32 %v962, %v964
          %v966 = vrot.slane %v958, %v965
          %v968 = vunpack.c.l.s4 1983009808
          %v969 = vunpack.c.0.s8 %v968
          %v970 = vlaneseq
          %v971 = vshrl.u32 %v970, 7
          %v972 = vsub.s32 %v969, %v971
          %v973 = vrot.slane %v959, %v972
          %v974 = vcombine.low %v950, %v956
          %v975 = vcombine.high %v950, %v956
          %v977 = vunpack.c.l.s4 1983009808
          %v978 = vunpack.c.0.s8 %v977
          %v979 = vlaneseq
          %v980 = vshrl.u32 %v979, 7
          %v981 = vsub.s32 %v978, %v980
          %v982 = vrot.slane %v974, %v981
          %v984 = vunpack.c.l.s4 1983009808
          %v985 = vunpack.c.0.s8 %v984
          %v986 = vlaneseq
          %v987 = vshrl.u32 %v986, 7
          %v988 = vsub.s32 %v985, %v987
          %v989 = vrot.slane %v975, %v988
          %v990 = vcombine.low %v966, %v982
          %v991 = vcombine.high %v966, %v982
          %v993 = vunpack.c.l.s4 1934713408
          %v994 = vunpack.c.0.s8 %v993
          %v995 = vlaneseq
          %v996 = vshrl.u32 %v995, 7
          %v997 = vsub.s32 %v994, %v996
          %v998 = vrot.slane %v990, %v997
          %v1000 = vunpack.c.l.s4 1934713408
          %v1001 = vunpack.c.0.s8 %v1000
          %v1002 = vlaneseq
          %v1003 = vshrl.u32 %v1002, 7
          %v1004 = vsub.s32 %v1001, %v1003
          %v1005 = vrot.slane %v991, %v1004
          %v1006 = vcombine.low %v973, %v989
          %v1007 = vcombine.high %v973, %v989
          %v1009 = vunpack.c.l.s4 1934713408
          %v1010 = vunpack.c.0.s8 %v1009
          %v1011 = vlaneseq
          %v1012 = vshrl.u32 %v1011, 7
          %v1013 = vsub.s32 %v1010, %v1012
          %v1014 = vrot.slane %v1006, %v1013
          %v1016 = vunpack.c.l.s4 1934713408
          %v1017 = vunpack.c.0.s8 %v1016
          %v1018 = vlaneseq
          %v1019 = vshrl.u32 %v1018, 7
          %v1020 = vsub.s32 %v1017, %v1019
          %v1021 = vrot.slane %v1007, %v1020
          %v1022 = vcombine.high %v998, 0.0
          %v1023 = vcombine.high %v1005, 0.0
          %v1024 = vcombine.high %v1014, 0.0
          %v1025 = vcombine.high %v1021, 0.0
          %v1026 = vcombine.low %v998, %v1005
          %v1028 = vunpack.c.l.s4 1983009808
          %v1029 = vunpack.c.0.s8 %v1028
          %v1030 = vlaneseq
          %v1031 = vshrl.u32 %v1030, 7
          %v1032 = vsub.s32 %v1029, %v1031
          %v1033 = vrot.slane %v1026, %v1032
          %v1034 = vcombine.low %v1022, %v1023
          %v1036 = vunpack.c.l.s4 1983009808
          %v1037 = vunpack.c.0.s8 %v1036
          %v1038 = vlaneseq
          %v1039 = vshrl.u32 %v1038, 7
          %v1040 = vsub.s32 %v1037, %v1039
          %v1041 = vrot.slane %v1034, %v1040
          %v1042 = vcombine.low %v1014, %v1021
          %v1044 = vunpack.c.l.s4 1983009808
          %v1045 = vunpack.c.0.s8 %v1044
          %v1046 = vlaneseq
          %v1047 = vshrl.u32 %v1046, 7
          %v1048 = vsub.s32 %v1045, %v1047
          %v1049 = vrot.slane %v1042, %v1048
          %v1050 = vcombine.low %v1024, %v1025
          %v1052 = vunpack.c.l.s4 1983009808
          %v1053 = vunpack.c.0.s8 %v1052
          %v1054 = vlaneseq
          %v1055 = vshrl.u32 %v1054, 7
          %v1056 = vsub.s32 %v1053, %v1055
          %v1057 = vrot.slane %v1050, %v1056
          %v1058 = vcombine.low %v1033, %v1041
          %v1059 = vcombine.high %v1033, %v1041
          %v1061 = vunpack.c.l.s4 1934713408
          %v1062 = vunpack.c.0.s8 %v1061
          %v1063 = vlaneseq
          %v1064 = vshrl.u32 %v1063, 7
          %v1065 = vsub.s32 %v1062, %v1064
          %v1066 = vrot.slane %v1058, %v1065
          %v1068 = vunpack.c.l.s4 1934713408
          %v1069 = vunpack.c.0.s8 %v1068
          %v1070 = vlaneseq
          %v1071 = vshrl.u32 %v1070, 7
          %v1072 = vsub.s32 %v1069, %v1071
          %v1073 = vrot.slane %v1059, %v1072
          %v1074 = vcombine.low %v1049, %v1057
          %v1075 = vcombine.high %v1049, %v1057
          %v1077 = vunpack.c.l.s4 1934713408
          %v1078 = vunpack.c.0.s8 %v1077
          %v1079 = vlaneseq
          %v1080 = vshrl.u32 %v1079, 7
          %v1081 = vsub.s32 %v1078, %v1080
          %v1082 = vrot.slane %v1074, %v1081
          %v1084 = vunpack.c.l.s4 1934713408
          %v1085 = vunpack.c.0.s8 %v1084
          %v1086 = vlaneseq
          %v1087 = vshrl.u32 %v1086, 7
          %v1088 = vsub.s32 %v1085, %v1087
          %v1089 = vrot.slane %v1075, %v1088
          %v1090 = vcombine.low %v1066, %v1082
          %v1091 = vcombine.high %v1066, %v1082
          %v1092 = vcombine.low %v1073, %v1089
          %v1093 = vcombine.high %v1073, %v1089
          %vm1094 = vcmask 64512
          %1095 = vst.msk [vmem:[#allocation2] sm:$0xff] %vm1094, %v944
          %1096 = vst.msk [vmem:[#allocation2 + $0x8] sm:$0xff] %vm1094, %v945
          %1097 = vst.msk [vmem:[#allocation2 + $0x10] sm:$0xff] %vm1094, %v946
          %1098 = vst.msk [vmem:[#allocation2 + $0x18] sm:$0xff] %vm1094, %v947
          %1099 = vst.msk [vmem:[#allocation3] sm:$0xff] %vm1094, %v1090
          %1100 = vst.msk [vmem:[#allocation3 + $0x8] sm:$0xff] %vm1094, %v1091
          %1101 = vst.msk [vmem:[#allocation3 + $0x10] sm:$0xff] %vm1094, %v1092
          %1102 = vst.msk [vmem:[#allocation3 + $0x18] sm:$0xff] %vm1094, %v1093
          %1107 = vrot.lane.b32.xlu0 %v1090, 8
          %v1108 = vpop.permute.xlu0 %1107
          %1109 = vrot.lane.b32.xlu0 %v1091, 8
          %v1110 = vpop.permute.xlu0 %1109
          %1111 = vrot.lane.b32.xlu0 %v1092, 8
          %v1112 = vpop.permute.xlu0 %1111
          %1113 = vrot.lane.b32.xlu0 %v1093, 8
          %v1114 = vpop.permute.xlu0 %1113
          %v1119 = vsel %vm1094, %v944, %v1108
          %v1120 = vsel %vm1094, %v945, %v1110
          %v1121 = vsel %vm1094, %v946, %v1112
          %v1122 = vsel %vm1094, %v947, %v1114
          %vm1123 = vcmask 130048
          %1124 = vst.msk [vmem:[%s623] sm:$0xff] %vm1123, %v1119
          %1125 = vst.msk [vmem:[%s623 + $0x8] sm:$0xff] %vm1123, %v1120
          %1126 = vst.msk [vmem:[%s623 + $0x10] sm:$0xff] %vm1123, %v1121
          %1127 = vst.msk [vmem:[%s623 + $0x18] sm:$0xff] %vm1123, %v1122
        $region100: #{tpu_custom_call.1} parent=67 // pred_fallthru
          _
        %v1128 = vld [vmem:[%s529] sm:$0xff]
        %v1129 = vld [vmem:[#allocation10] sm:$0xff]
        %v1130 = vld [vmem:[#allocation10 + $0x8] sm:$0xff]
        %v1131 = vld [vmem:[#allocation10 + $0x10] sm:$0xff]
        %v1132 = vld [vmem:[#allocation10 + $0x18] sm:$0xff]
        %v1133 = vld [vmem:[%s5] sm:$0x1]
        %v1135 = vlaneseq
        %v1136 = vshrl.u32 %v1135, 7
        %v1137 = vsub.s32 0, %v1136
        %v1138 = vrot.slane %v1133, %v1137
        %vm1140 = vcmask 261120
        %v1142 = vsel %vm1140, %v1128, 0
        %1144 = vmatprep.subr.mxu0 0.0
        %1145 = vmatpush1.msra.mxu0 0.0
        %1146 = vmatprep.subr.mxu0 0.0
        %1147 = vmatpush1.msra.mxu0 0.0
        %1148 = vmatprep.subr.mxu0 0.0
        %1149 = vmatpush1.msra.mxu0 0.0
        %1150 = vmatprep.subr.mxu0 0.0
        %1151 = vmatpush1.msra.mxu0 0.0
        %1152 = vmatprep.subr.mxu0 0.0
        %1153 = vmatpush1.msra.mxu0 0.0
        %1154 = vmatprep.subr.mxu0 0.0
        %1155 = vmatpush1.msra.mxu0 0.0
        %1156 = vmatprep.subr.mxu0 0.0
        %1157 = vmatpush1.msra.mxu0 0.0
        %1158 = vmatprep.subr.mxu0 0.0
        %1159 = vmatpush1.msra.mxu0 0.0
        %1160 = vmatprep.subr.mxu0 0.0
        %1161 = vmatpush1.msra.mxu0 0.0
        %1162 = vmatprep.subr.mxu0 0.0
        %1163 = vmatpush1.msra.mxu0 0.0
        %1164 = vmatprep.subr.mxu0 0.0
        %1165 = vmatpush1.msra.mxu0 0.0
        %1166 = vmatprep.subr.mxu0 0.0
        %1167 = vmatpush1.msra.mxu0 0.0
        %1168 = vmatprep.subr.mxu0 0.0
        %1169 = vmatpush1.msra.mxu0 %v1132
        %1170 = vmatprep.subr.mxu0 0.0
        %1171 = vmatpush1.msra.mxu0 %v1131
        %1172 = vmatprep.subr.mxu0 0.0
        %1173 = vmatpush1.msra.mxu0 %v1130
        %1174 = vmatprep.subr.mxu0 0.0
        %1175 = vmatpush1.msra.mxu0 %v1129
        %1176 = vmatprep.subr.mxu0 0.0
        %1177 = vmatpush2.msra.mxu0 0.0
        %1178 = vmatprep.subr.mxu0 0.0
        %1179 = vmatpush2.msra.mxu0 0.0
        %1180 = vmatprep.subr.mxu0 0.0
        %1181 = vmatpush2.msra.mxu0 0.0
        %1182 = vmatprep.subr.mxu0 0.0
        %1183 = vmatpush2.msra.mxu0 0.0
        %1184 = vmatprep.subr.mxu0 0.0
        %1185 = vmatpush2.msra.mxu0 0.0
        %1186 = vmatprep.subr.mxu0 0.0
        %1187 = vmatpush2.msra.mxu0 0.0
        %1188 = vmatprep.subr.mxu0 0.0
        %1189 = vmatpush2.msra.mxu0 0.0
        %1190 = vmatprep.subr.mxu0 0.0
        %1191 = vmatpush2.msra.mxu0 0.0
        %1192 = vmatprep.subr.mxu0 0.0
        %1193 = vmatpush2.msra.mxu0 0.0
        %1194 = vmatprep.subr.mxu0 0.0
        %1195 = vmatpush2.msra.mxu0 0.0
        %1196 = vmatprep.subr.mxu0 0.0
        %1197 = vmatpush2.msra.mxu0 0.0
        %1198 = vmatprep.subr.mxu0 0.0
        %1199 = vmatpush2.msra.mxu0 0.0
        %1200 = vmatprep.subr.mxu0 0.0
        %1201 = vmatpush2.msra.mxu0 0.0
        %1202 = vmatprep.subr.mxu0 0.0
        %1203 = vmatpush2.msra.mxu0 0.0
        %1204 = vmatprep.subr.mxu0 0.0
        %1205 = vmatpush2.msra.mxu0 0.0
        %1206 = vmatprep.subr.mxu0 0.0
        %1207 = vmatpush2.msra.mxu0 0.0
        %1208 = vmatprep.mubr.f32.mxu0 0.0
        %1209 = vmatmul.mubr.f32.gmra.mxu0 %v1142
        %v1210 = vpop.f32.mrf.mxu0
        %v1211 = vadd.f32 %v1138, %v1210
        %v1212 = vpop.f32.mrf.mxu0
        %1213 = vdwg.mxu0
        %v1214 = vmul.f32 %v1211, 0.35355338
        %1216 = vrot.lane.b32.xlu0 %v1214, 120
        %v1217 = vpop.permute.xlu0 %1216
        %1219 = vrot.lane.b32.xlu0 %v1214, 112
        %v1220 = vpop.permute.xlu0 %1219
        %1222 = vrot.lane.b32.xlu0 %v1214, 104
        %v1223 = vpop.permute.xlu0 %1222
        %v1225 = vcombine.low %v1214, %v1220
        %v1226 = vcombine.high %v1214, %v1220
        %v1228 = vunpack.c.l.s4 1983009808
        %v1229 = vunpack.c.0.s8 %v1228
        %v1230 = vlaneseq
        %v1231 = vshrl.u32 %v1230, 7
        %v1232 = vsub.s32 %v1229, %v1231
        %v1233 = vrot.slane %v1225, %v1232
        %v1235 = vunpack.c.l.s4 1983009808
        %v1236 = vunpack.c.0.s8 %v1235
        %v1237 = vlaneseq
        %v1238 = vshrl.u32 %v1237, 7
        %v1239 = vsub.s32 %v1236, %v1238
        %v1240 = vrot.slane %v1226, %v1239
        %v1241 = vcombine.low %v1217, %v1223
        %v1242 = vcombine.high %v1217, %v1223
        %v1244 = vunpack.c.l.s4 1983009808
        %v1245 = vunpack.c.0.s8 %v1244
        %v1246 = vlaneseq
        %v1247 = vshrl.u32 %v1246, 7
        %v1248 = vsub.s32 %v1245, %v1247
        %v1249 = vrot.slane %v1241, %v1248
        %v1251 = vunpack.c.l.s4 1983009808
        %v1252 = vunpack.c.0.s8 %v1251
        %v1253 = vlaneseq
        %v1254 = vshrl.u32 %v1253, 7
        %v1255 = vsub.s32 %v1252, %v1254
        %v1256 = vrot.slane %v1242, %v1255
        %v1257 = vcombine.low %v1233, %v1249
        %v1258 = vcombine.high %v1233, %v1249
        %v1260 = vunpack.c.l.s4 1934713408
        %v1261 = vunpack.c.0.s8 %v1260
        %v1262 = vlaneseq
        %v1263 = vshrl.u32 %v1262, 7
        %v1264 = vsub.s32 %v1261, %v1263
        %v1265 = vrot.slane %v1257, %v1264
        %v1267 = vunpack.c.l.s4 1934713408
        %v1268 = vunpack.c.0.s8 %v1267
        %v1269 = vlaneseq
        %v1270 = vshrl.u32 %v1269, 7
        %v1271 = vsub.s32 %v1268, %v1270
        %v1272 = vrot.slane %v1258, %v1271
        %v1273 = vcombine.low %v1240, %v1256
        %v1274 = vcombine.high %v1240, %v1256
        %v1276 = vunpack.c.l.s4 1934713408
        %v1277 = vunpack.c.0.s8 %v1276
        %v1278 = vlaneseq
        %v1279 = vshrl.u32 %v1278, 7
        %v1280 = vsub.s32 %v1277, %v1279
        %v1281 = vrot.slane %v1273, %v1280
        %v1283 = vunpack.c.l.s4 1934713408
        %v1284 = vunpack.c.0.s8 %v1283
        %v1285 = vlaneseq
        %v1286 = vshrl.u32 %v1285, 7
        %v1287 = vsub.s32 %v1284, %v1286
        %v1288 = vrot.slane %v1274, %v1287
        %v1289 = vcombine.high %v1265, 0.0
        %v1290 = vcombine.high %v1272, 0.0
        %v1291 = vcombine.high %v1281, 0.0
        %v1292 = vcombine.high %v1288, 0.0
        %v1293 = vcombine.low %v1265, %v1272
        %v1295 = vunpack.c.l.s4 1983009808
        %v1296 = vunpack.c.0.s8 %v1295
        %v1297 = vlaneseq
        %v1298 = vshrl.u32 %v1297, 7
        %v1299 = vsub.s32 %v1296, %v1298
        %v1300 = vrot.slane %v1293, %v1299
        %v1301 = vcombine.low %v1289, %v1290
        %v1303 = vunpack.c.l.s4 1983009808
        %v1304 = vunpack.c.0.s8 %v1303
        %v1305 = vlaneseq
        %v1306 = vshrl.u32 %v1305, 7
        %v1307 = vsub.s32 %v1304, %v1306
        %v1308 = vrot.slane %v1301, %v1307
        %v1309 = vcombine.low %v1281, %v1288
        %v1311 = vunpack.c.l.s4 1983009808
        %v1312 = vunpack.c.0.s8 %v1311
        %v1313 = vlaneseq
        %v1314 = vshrl.u32 %v1313, 7
        %v1315 = vsub.s32 %v1312, %v1314
        %v1316 = vrot.slane %v1309, %v1315
        %v1317 = vcombine.low %v1291, %v1292
        %v1319 = vunpack.c.l.s4 1983009808
        %v1320 = vunpack.c.0.s8 %v1319
        %v1321 = vlaneseq
        %v1322 = vshrl.u32 %v1321, 7
        %v1323 = vsub.s32 %v1320, %v1322
        %v1324 = vrot.slane %v1317, %v1323
        %v1325 = vcombine.low %v1300, %v1308
        %v1326 = vcombine.high %v1300, %v1308
        %v1328 = vunpack.c.l.s4 1934713408
        %v1329 = vunpack.c.0.s8 %v1328
        %v1330 = vlaneseq
        %v1331 = vshrl.u32 %v1330, 7
        %v1332 = vsub.s32 %v1329, %v1331
        %v1333 = vrot.slane %v1325, %v1332
        %v1335 = vunpack.c.l.s4 1934713408
        %v1336 = vunpack.c.0.s8 %v1335
        %v1337 = vlaneseq
        %v1338 = vshrl.u32 %v1337, 7
        %v1339 = vsub.s32 %v1336, %v1338
        %v1340 = vrot.slane %v1326, %v1339
        %v1341 = vcombine.low %v1316, %v1324
        %v1342 = vcombine.high %v1316, %v1324
        %v1344 = vunpack.c.l.s4 1934713408
        %v1345 = vunpack.c.0.s8 %v1344
        %v1346 = vlaneseq
        %v1347 = vshrl.u32 %v1346, 7
        %v1348 = vsub.s32 %v1345, %v1347
        %v1349 = vrot.slane %v1341, %v1348
        %v1351 = vunpack.c.l.s4 1934713408
        %v1352 = vunpack.c.0.s8 %v1351
        %v1353 = vlaneseq
        %v1354 = vshrl.u32 %v1353, 7
        %v1355 = vsub.s32 %v1352, %v1354
        %v1356 = vrot.slane %v1342, %v1355
        %v1357 = vcombine.low %v1333, %v1349
        %v1358 = vcombine.high %v1333, %v1349
        %v1359 = vcombine.low %v1340, %v1356
        %v1360 = vcombine.high %v1340, %v1356
        %v1361 = vld [vmem:[#allocation2] sm:$0xff]
        %v1362 = vld [vmem:[#allocation2 + $0x8] sm:$0xff]
        %v1363 = vld [vmem:[#allocation2 + $0x10] sm:$0xff]
        %v1364 = vld [vmem:[#allocation2 + $0x18] sm:$0xff]
        %v1365 = vld [vmem:[#allocation3] sm:$0xff]
        %v1366 = vld [vmem:[#allocation3 + $0x8] sm:$0xff]
        %v1367 = vld [vmem:[#allocation3 + $0x10] sm:$0xff]
        %v1368 = vld [vmem:[#allocation3 + $0x18] sm:$0xff]
        %v1369 = vld [vmem:[%s626] sm:$0x1]
        %vm1370 = vcmp.ne.s32.totalorder %v1369, 0
        %v1371 = vsel %vm1370, 0.0, -1e+30
        %v1373 = vlaneseq
        %v1374 = vshrl.u32 %v1373, 7
        %v1375 = vsub.s32 0, %v1374
        %v1376 = vrot.slane %v1371, %v1375
        %vm1378 = vcmask 64512
        %v1380 = vsel %vm1378, %v1357, 0
        %v1383 = vsel %vm1378, %v1361, 0
        %1385 = vmatprep.subr.mxu0 0.0
        %1386 = vmatpush1.xpose.msra.mxu0 0.0
        %1387 = vmatprep.subr.mxu0 0.0
        %1388 = vmatpush1.xpose.msra.mxu0 0.0
        %1389 = vmatprep.subr.mxu0 0.0
        %1390 = vmatpush1.xpose.msra.mxu0 0.0
        %1391 = vmatprep.subr.mxu0 0.0
        %1392 = vmatpush1.xpose.msra.mxu0 0.0
        %1393 = vmatprep.subr.mxu0 0.0
        %1394 = vmatpush1.xpose.msra.mxu0 0.0
        %1395 = vmatprep.subr.mxu0 0.0
        %1396 = vmatpush1.xpose.msra.mxu0 0.0
        %1397 = vmatprep.subr.mxu0 0.0
        %1398 = vmatpush1.xpose.msra.mxu0 0.0
        %1399 = vmatprep.subr.mxu0 0.0
        %1400 = vmatpush1.xpose.msra.mxu0 0.0
        %1401 = vmatprep.subr.mxu0 0.0
        %1402 = vmatpush1.xpose.msra.mxu0 0.0
        %1403 = vmatprep.subr.mxu0 0.0
        %1404 = vmatpush1.xpose.msra.mxu0 0.0
        %1405 = vmatprep.subr.mxu0 0.0
        %1406 = vmatpush1.xpose.msra.mxu0 0.0
        %1407 = vmatprep.subr.mxu0 0.0
        %1408 = vmatpush1.xpose.msra.mxu0 0.0
        %1409 = vmatprep.subr.mxu0 0.0
        %1410 = vmatpush1.xpose.msra.mxu0 0.0
        %1411 = vmatprep.subr.mxu0 0.0
        %1412 = vmatpush1.xpose.msra.mxu0 0.0
        %1413 = vmatprep.subr.mxu0 0.0
        %1414 = vmatpush1.xpose.msra.mxu0 0.0
        %1415 = vmatprep.subr.mxu0 0.0
        %1416 = vmatpush1.xpose.msra.mxu0 %v1383
        %1417 = vmatprep.subr.mxu0 0.0
        %1418 = vmatpush2.xpose.msra.mxu0 0.0
        %1419 = vmatprep.subr.mxu0 0.0
        %1420 = vmatpush2.xpose.msra.mxu0 0.0
        %1421 = vmatprep.subr.mxu0 0.0
        %1422 = vmatpush2.xpose.msra.mxu0 0.0
        %1423 = vmatprep.subr.mxu0 0.0
        %1424 = vmatpush2.xpose.msra.mxu0 0.0
        %1425 = vmatprep.subr.mxu0 0.0
        %1426 = vmatpush2.xpose.msra.mxu0 0.0
        %1427 = vmatprep.subr.mxu0 0.0
        %1428 = vmatpush2.xpose.msra.mxu0 0.0
        %1429 = vmatprep.subr.mxu0 0.0
        %1430 = vmatpush2.xpose.msra.mxu0 0.0
        %1431 = vmatprep.subr.mxu0 0.0
        %1432 = vmatpush2.xpose.msra.mxu0 0.0
        %1433 = vmatprep.subr.mxu0 0.0
        %1434 = vmatpush2.xpose.msra.mxu0 0.0
        %1435 = vmatprep.subr.mxu0 0.0
        %1436 = vmatpush2.xpose.msra.mxu0 0.0
        %1437 = vmatprep.subr.mxu0 0.0
        %1438 = vmatpush2.xpose.msra.mxu0 0.0
        %1439 = vmatprep.subr.mxu0 0.0
        %1440 = vmatpush2.xpose.msra.mxu0 0.0
        %1441 = vmatprep.subr.mxu0 0.0
        %1442 = vmatpush2.xpose.msra.mxu0 0.0
        %1443 = vmatprep.subr.mxu0 0.0
        %1444 = vmatpush2.xpose.msra.mxu0 0.0
        %1445 = vmatprep.subr.mxu0 0.0
        %1446 = vmatpush2.xpose.msra.mxu0 0.0
        %1447 = vmatprep.subr.mxu0 0.0
        %1448 = vmatpush2.xpose.msra.mxu0 0.0
        %1449 = vmatprep.mubr.f32.mxu0 0.0
        %1450 = vmatmul.mubr.f32.gmra.mxu0 %v1380
        %v1451 = vpop.f32.mrf.mxu0
        %v1452 = vadd.f32 %v1376, %v1451
        %v1453 = vpop.f32.mrf.mxu0
        %1454 = vdwg.mxu0
        %v1456 = vsel %vm1378, %v1358, 0
        %v1459 = vsel %vm1378, %v1362, 0
        %1461 = vmatprep.subr.mxu0 0.0
        %1462 = vmatpush1.xpose.msra.mxu0 0.0
        %1463 = vmatprep.subr.mxu0 0.0
        %1464 = vmatpush1.xpose.msra.mxu0 0.0
        %1465 = vmatprep.subr.mxu0 0.0
        %1466 = vmatpush1.xpose.msra.mxu0 0.0
        %1467 = vmatprep.subr.mxu0 0.0
        %1468 = vmatpush1.xpose.msra.mxu0 0.0
        %1469 = vmatprep.subr.mxu0 0.0
        %1470 = vmatpush1.xpose.msra.mxu0 0.0
        %1471 = vmatprep.subr.mxu0 0.0
        %1472 = vmatpush1.xpose.msra.mxu0 0.0
        %1473 = vmatprep.subr.mxu0 0.0
        %1474 = vmatpush1.xpose.msra.mxu0 0.0
        %1475 = vmatprep.subr.mxu0 0.0
        %1476 = vmatpush1.xpose.msra.mxu0 0.0
        %1477 = vmatprep.subr.mxu0 0.0
        %1478 = vmatpush1.xpose.msra.mxu0 0.0
        %1479 = vmatprep.subr.mxu0 0.0
        %1480 = vmatpush1.xpose.msra.mxu0 0.0
        %1481 = vmatprep.subr.mxu0 0.0
        %1482 = vmatpush1.xpose.msra.mxu0 0.0
        %1483 = vmatprep.subr.mxu0 0.0
        %1484 = vmatpush1.xpose.msra.mxu0 0.0
        %1485 = vmatprep.subr.mxu0 0.0
        %1486 = vmatpush1.xpose.msra.mxu0 0.0
        %1487 = vmatprep.subr.mxu0 0.0
        %1488 = vmatpush1.xpose.msra.mxu0 0.0
        %1489 = vmatprep.subr.mxu0 0.0
        %1490 = vmatpush1.xpose.msra.mxu0 0.0
        %1491 = vmatprep.subr.mxu0 0.0
        %1492 = vmatpush1.xpose.msra.mxu0 %v1459
        %1493 = vmatprep.subr.mxu0 0.0
        %1494 = vmatpush2.xpose.msra.mxu0 0.0
        %1495 = vmatprep.subr.mxu0 0.0
        %1496 = vmatpush2.xpose.msra.mxu0 0.0
        %1497 = vmatprep.subr.mxu0 0.0
        %1498 = vmatpush2.xpose.msra.mxu0 0.0
        %1499 = vmatprep.subr.mxu0 0.0
        %1500 = vmatpush2.xpose.msra.mxu0 0.0
        %1501 = vmatprep.subr.mxu0 0.0
        %1502 = vmatpush2.xpose.msra.mxu0 0.0
        %1503 = vmatprep.subr.mxu0 0.0
        %1504 = vmatpush2.xpose.msra.mxu0 0.0
        %1505 = vmatprep.subr.mxu0 0.0
        %1506 = vmatpush2.xpose.msra.mxu0 0.0
        %1507 = vmatprep.subr.mxu0 0.0
        %1508 = vmatpush2.xpose.msra.mxu0 0.0
        %1509 = vmatprep.subr.mxu0 0.0
        %1510 = vmatpush2.xpose.msra.mxu0 0.0
        %1511 = vmatprep.subr.mxu0 0.0
        %1512 = vmatpush2.xpose.msra.mxu0 0.0
        %1513 = vmatprep.subr.mxu0 0.0
        %1514 = vmatpush2.xpose.msra.mxu0 0.0
        %1515 = vmatprep.subr.mxu0 0.0
        %1516 = vmatpush2.xpose.msra.mxu0 0.0
        %1517 = vmatprep.subr.mxu0 0.0
        %1518 = vmatpush2.xpose.msra.mxu0 0.0
        %1519 = vmatprep.subr.mxu0 0.0
        %1520 = vmatpush2.xpose.msra.mxu0 0.0
        %1521 = vmatprep.subr.mxu0 0.0
        %1522 = vmatpush2.xpose.msra.mxu0 0.0
        %1523 = vmatprep.subr.mxu0 0.0
        %1524 = vmatpush2.xpose.msra.mxu0 0.0
        %1525 = vmatprep.mubr.f32.mxu0 0.0
        %1526 = vmatmul.mubr.f32.gmra.mxu0 %v1456
        %v1527 = vpop.f32.mrf.mxu0
        %v1528 = vadd.f32 %v1376, %v1527
        %v1529 = vpop.f32.mrf.mxu0
        %1530 = vdwg.mxu0
        %v1532 = vsel %vm1378, %v1359, 0
        %v1535 = vsel %vm1378, %v1363, 0
        %1537 = vmatprep.subr.mxu0 0.0
        %1538 = vmatpush1.xpose.msra.mxu0 0.0
        %1539 = vmatprep.subr.mxu0 0.0
        %1540 = vmatpush1.xpose.msra.mxu0 0.0
        %1541 = vmatprep.subr.mxu0 0.0
        %1542 = vmatpush1.xpose.msra.mxu0 0.0
        %1543 = vmatprep.subr.mxu0 0.0
        %1544 = vmatpush1.xpose.msra.mxu0 0.0
        %1545 = vmatprep.subr.mxu0 0.0
        %1546 = vmatpush1.xpose.msra.mxu0 0.0
        %1547 = vmatprep.subr.mxu0 0.0
        %1548 = vmatpush1.xpose.msra.mxu0 0.0
        %1549 = vmatprep.subr.mxu0 0.0
        %1550 = vmatpush1.xpose.msra.mxu0 0.0
        %1551 = vmatprep.subr.mxu0 0.0
        %1552 = vmatpush1.xpose.msra.mxu0 0.0
        %1553 = vmatprep.subr.mxu0 0.0
        %1554 = vmatpush1.xpose.msra.mxu0 0.0
        %1555 = vmatprep.subr.mxu0 0.0
        %1556 = vmatpush1.xpose.msra.mxu0 0.0
        %1557 = vmatprep.subr.mxu0 0.0
        %1558 = vmatpush1.xpose.msra.mxu0 0.0
        %1559 = vmatprep.subr.mxu0 0.0
        %1560 = vmatpush1.xpose.msra.mxu0 0.0
        %1561 = vmatprep.subr.mxu0 0.0
        %1562 = vmatpush1.xpose.msra.mxu0 0.0
        %1563 = vmatprep.subr.mxu0 0.0
        %1564 = vmatpush1.xpose.msra.mxu0 0.0
        %1565 = vmatprep.subr.mxu0 0.0
        %1566 = vmatpush1.xpose.msra.mxu0 0.0
        %1567 = vmatprep.subr.mxu0 0.0
        %1568 = vmatpush1.xpose.msra.mxu0 %v1535
        %1569 = vmatprep.subr.mxu0 0.0
        %1570 = vmatpush2.xpose.msra.mxu0 0.0
        %1571 = vmatprep.subr.mxu0 0.0
        %1572 = vmatpush2.xpose.msra.mxu0 0.0
        %1573 = vmatprep.subr.mxu0 0.0
        %1574 = vmatpush2.xpose.msra.mxu0 0.0
        %1575 = vmatprep.subr.mxu0 0.0
        %1576 = vmatpush2.xpose.msra.mxu0 0.0
        %1577 = vmatprep.subr.mxu0 0.0
        %1578 = vmatpush2.xpose.msra.mxu0 0.0
        %1579 = vmatprep.subr.mxu0 0.0
        %1580 = vmatpush2.xpose.msra.mxu0 0.0
        %1581 = vmatprep.subr.mxu0 0.0
        %1582 = vmatpush2.xpose.msra.mxu0 0.0
        %1583 = vmatprep.subr.mxu0 0.0
        %1584 = vmatpush2.xpose.msra.mxu0 0.0
        %1585 = vmatprep.subr.mxu0 0.0
        %1586 = vmatpush2.xpose.msra.mxu0 0.0
        %1587 = vmatprep.subr.mxu0 0.0
        %1588 = vmatpush2.xpose.msra.mxu0 0.0
        %1589 = vmatprep.subr.mxu0 0.0
        %1590 = vmatpush2.xpose.msra.mxu0 0.0
        %1591 = vmatprep.subr.mxu0 0.0
        %1592 = vmatpush2.xpose.msra.mxu0 0.0
        %1593 = vmatprep.subr.mxu0 0.0
        %1594 = vmatpush2.xpose.msra.mxu0 0.0
        %1595 = vmatprep.subr.mxu0 0.0
        %1596 = vmatpush2.xpose.msra.mxu0 0.0
        %1597 = vmatprep.subr.mxu0 0.0
        %1598 = vmatpush2.xpose.msra.mxu0 0.0
        %1599 = vmatprep.subr.mxu0 0.0
        %1600 = vmatpush2.xpose.msra.mxu0 0.0
        %1601 = vmatprep.mubr.f32.mxu0 0.0
        %1602 = vmatmul.mubr.f32.gmra.mxu0 %v1532
        %v1603 = vpop.f32.mrf.mxu0
        %v1604 = vadd.f32 %v1376, %v1603
        %v1605 = vpop.f32.mrf.mxu0
        %1606 = vdwg.mxu0
        %v1608 = vsel %vm1378, %v1360, 0
        %v1611 = vsel %vm1378, %v1364, 0
        %1613 = vmatprep.subr.mxu0 0.0
        %1614 = vmatpush1.xpose.msra.mxu0 0.0
        %1615 = vmatprep.subr.mxu0 0.0
        %1616 = vmatpush1.xpose.msra.mxu0 0.0
        %1617 = vmatprep.subr.mxu0 0.0
        %1618 = vmatpush1.xpose.msra.mxu0 0.0
        %1619 = vmatprep.subr.mxu0 0.0
        %1620 = vmatpush1.xpose.msra.mxu0 0.0
        %1621 = vmatprep.subr.mxu0 0.0
        %1622 = vmatpush1.xpose.msra.mxu0 0.0
        %1623 = vmatprep.subr.mxu0 0.0
        %1624 = vmatpush1.xpose.msra.mxu0 0.0
        %1625 = vmatprep.subr.mxu0 0.0
        %1626 = vmatpush1.xpose.msra.mxu0 0.0
        %1627 = vmatprep.subr.mxu0 0.0
        %1628 = vmatpush1.xpose.msra.mxu0 0.0
        %1629 = vmatprep.subr.mxu0 0.0
        %1630 = vmatpush1.xpose.msra.mxu0 0.0
        %1631 = vmatprep.subr.mxu0 0.0
        %1632 = vmatpush1.xpose.msra.mxu0 0.0
        %1633 = vmatprep.subr.mxu0 0.0
        %1634 = vmatpush1.xpose.msra.mxu0 0.0
        %1635 = vmatprep.subr.mxu0 0.0
        %1636 = vmatpush1.xpose.msra.mxu0 0.0
        %1637 = vmatprep.subr.mxu0 0.0
        %1638 = vmatpush1.xpose.msra.mxu0 0.0
        %1639 = vmatprep.subr.mxu0 0.0
        %1640 = vmatpush1.xpose.msra.mxu0 0.0
        %1641 = vmatprep.subr.mxu0 0.0
        %1642 = vmatpush1.xpose.msra.mxu0 0.0
        %1643 = vmatprep.subr.mxu0 0.0
        %1644 = vmatpush1.xpose.msra.mxu0 %v1611
        %1645 = vmatprep.subr.mxu0 0.0
        %1646 = vmatpush2.xpose.msra.mxu0 0.0
        %1647 = vmatprep.subr.mxu0 0.0
        %1648 = vmatpush2.xpose.msra.mxu0 0.0
        %1649 = vmatprep.subr.mxu0 0.0
        %1650 = vmatpush2.xpose.msra.mxu0 0.0
        %1651 = vmatprep.subr.mxu0 0.0
        %1652 = vmatpush2.xpose.msra.mxu0 0.0
        %1653 = vmatprep.subr.mxu0 0.0
        %1654 = vmatpush2.xpose.msra.mxu0 0.0
        %1655 = vmatprep.subr.mxu0 0.0
        %1656 = vmatpush2.xpose.msra.mxu0 0.0
        %1657 = vmatprep.subr.mxu0 0.0
        %1658 = vmatpush2.xpose.msra.mxu0 0.0
        %1659 = vmatprep.subr.mxu0 0.0
        %1660 = vmatpush2.xpose.msra.mxu0 0.0
        %1661 = vmatprep.subr.mxu0 0.0
        %1662 = vmatpush2.xpose.msra.mxu0 0.0
        %1663 = vmatprep.subr.mxu0 0.0
        %1664 = vmatpush2.xpose.msra.mxu0 0.0
        %1665 = vmatprep.subr.mxu0 0.0
        %1666 = vmatpush2.xpose.msra.mxu0 0.0
        %1667 = vmatprep.subr.mxu0 0.0
        %1668 = vmatpush2.xpose.msra.mxu0 0.0
        %1669 = vmatprep.subr.mxu0 0.0
        %1670 = vmatpush2.xpose.msra.mxu0 0.0
        %1671 = vmatprep.subr.mxu0 0.0
        %1672 = vmatpush2.xpose.msra.mxu0 0.0
        %1673 = vmatprep.subr.mxu0 0.0
        %1674 = vmatpush2.xpose.msra.mxu0 0.0
        %1675 = vmatprep.subr.mxu0 0.0
        %1676 = vmatpush2.xpose.msra.mxu0 0.0
        %1677 = vmatprep.mubr.f32.mxu0 0.0
        %1678 = vmatmul.mubr.f32.gmra.mxu0 %v1608
        %v1679 = vpop.f32.mrf.mxu0
        %v1680 = vadd.f32 %v1376, %v1679
        %v1681 = vpop.f32.mrf.mxu0
        %1682 = vdwg.mxu0
        %v1683 = vsel %vm1378, %v1452, -inf
        %1684 = vmax.xlane.f32.xlu0 %v1683
        %v1685 = vpop.xlane.xlu0 %1684
        %v1686 = vsel %vm1378, %v1528, -inf
        %1687 = vmax.xlane.f32.xlu0 %v1686
        %v1688 = vpop.xlane.xlu0 %1687
        %v1689 = vsel %vm1378, %v1604, -inf
        %1690 = vmax.xlane.f32.xlu0 %v1689
        %v1691 = vpop.xlane.xlu0 %1690
        %v1692 = vsel %vm1378, %v1680, -inf
        %1693 = vmax.xlane.f32.xlu0 %v1692
        %v1694 = vpop.xlane.xlu0 %1693
        %v1695 = vsub.f32 %v1452, %v1685
        %v1696 = vsub.f32 %v1528, %v1688
        %v1697 = vsub.f32 %v1604, %v1691
        %v1698 = vsub.f32 %v1680, %v1694
        %v1699 = vmul.f32 %v1695, 1.442695
        %v1700 = vpow.pop %v1699
        %v1701 = vmul.f32 %v1696, 1.442695
        %v1702 = vpow.pop %v1701
        %v1703 = vmul.f32 %v1697, 1.442695
        %v1704 = vpow.pop %v1703
        %v1705 = vmul.f32 %v1698, 1.442695
        %v1706 = vpow.pop %v1705
        %v1707 = vsel %vm1378, %v1700, 0.0
        %1708 = vadd.xlane.f32.xlu0 %v1707
        %v1709 = vpop.xlane.xlu0 %1708
        %v1710 = vsel %vm1378, %v1702, 0.0
        %1711 = vadd.xlane.f32.xlu0 %v1710
        %v1712 = vpop.xlane.xlu0 %1711
        %v1713 = vsel %vm1378, %v1704, 0.0
        %1714 = vadd.xlane.f32.xlu0 %v1713
        %v1715 = vpop.xlane.xlu0 %1714
        %v1716 = vsel %vm1378, %v1706, 0.0
        %1717 = vadd.xlane.f32.xlu0 %v1716
        %v1718 = vpop.xlane.xlu0 %1717
        %v1719 = vrcp.pop %v1709
        %v1720 = vrcp.pop %v1712
        %v1721 = vrcp.pop %v1715
        %v1722 = vrcp.pop %v1718
        %v1723 = vmul.f32 %v1700, %v1719
        %v1724 = vmul.f32 %v1702, %v1720
        %v1725 = vmul.f32 %v1704, %v1721
        %v1726 = vmul.f32 %v1706, %v1722
        %v1727 = vsel %vm1370, 1, 0
        %v1728 = vlaneseq
        %v1729 = vshrl.u32 %v1728, 7
        %v1730 = vsub.s32 0, %v1729
        %v1731 = vrot.slane %v1727, %v1730
        %vm1732 = vcmp.eq.s32.totalorder %v1731, 1
        %v1733 = vsel %vm1732, %v1723, 0.0
        %v1734 = vsel %vm1732, %v1724, 0.0
        %v1735 = vsel %vm1732, %v1725, 0.0
        %v1736 = vsel %vm1732, %v1726, 0.0
        %v1738 = vsel %vm1378, %v1733, 0
        %1740 = vmatprep.subr.mxu0 0.0
        %1741 = vmatpush1.msra.mxu0 0.0
        %1742 = vmatprep.subr.mxu0 0.0
        %1743 = vmatpush1.msra.mxu0 0.0
        %1744 = vmatprep.subr.mxu0 0.0
        %1745 = vmatpush1.msra.mxu0 0.0
        %1746 = vmatprep.subr.mxu0 0.0
        %1747 = vmatpush1.msra.mxu0 0.0
        %1748 = vmatprep.subr.mxu0 0.0
        %1749 = vmatpush1.msra.mxu0 0.0
        %1750 = vmatprep.subr.mxu0 0.0
        %1751 = vmatpush1.msra.mxu0 0.0
        %1752 = vmatprep.subr.mxu0 0.0
        %1753 = vmatpush1.msra.mxu0 0.0
        %1754 = vmatprep.subr.mxu0 0.0
        %1755 = vmatpush1.msra.mxu0 0.0
        %1756 = vmatprep.subr.mxu0 0.0
        %1757 = vmatpush1.msra.mxu0 0.0
        %1758 = vmatprep.subr.mxu0 0.0
        %1759 = vmatpush1.msra.mxu0 0.0
        %1760 = vmatprep.subr.mxu0 0.0
        %1761 = vmatpush1.msra.mxu0 0.0
        %1762 = vmatprep.subr.mxu0 0.0
        %1763 = vmatpush1.msra.mxu0 0.0
        %1764 = vmatprep.subr.mxu0 0.0
        %1765 = vmatpush1.msra.mxu0 0.0
        %1766 = vmatprep.subr.mxu0 0.0
        %1767 = vmatpush1.msra.mxu0 0.0
        %1768 = vmatprep.subr.mxu0 0.0
        %1769 = vmatpush1.msra.mxu0 0.0
        %1770 = vmatprep.subr.mxu0 0.0
        %1771 = vmatpush1.msra.mxu0 %v1365
        %1772 = vmatprep.subr.mxu0 0.0
        %1773 = vmatpush2.msra.mxu0 0.0
        %1774 = vmatprep.subr.mxu0 0.0
        %1775 = vmatpush2.msra.mxu0 0.0
        %1776 = vmatprep.subr.mxu0 0.0
        %1777 = vmatpush2.msra.mxu0 0.0
        %1778 = vmatprep.subr.mxu0 0.0
        %1779 = vmatpush2.msra.mxu0 0.0
        %1780 = vmatprep.subr.mxu0 0.0
        %1781 = vmatpush2.msra.mxu0 0.0
        %1782 = vmatprep.subr.mxu0 0.0
        %1783 = vmatpush2.msra.mxu0 0.0
        %1784 = vmatprep.subr.mxu0 0.0
        %1785 = vmatpush2.msra.mxu0 0.0
        %1786 = vmatprep.subr.mxu0 0.0
        %1787 = vmatpush2.msra.mxu0 0.0
        %1788 = vmatprep.subr.mxu0 0.0
        %1789 = vmatpush2.msra.mxu0 0.0
        %1790 = vmatprep.subr.mxu0 0.0
        %1791 = vmatpush2.msra.mxu0 0.0
        %1792 = vmatprep.subr.mxu0 0.0
        %1793 = vmatpush2.msra.mxu0 0.0
        %1794 = vmatprep.subr.mxu0 0.0
        %1795 = vmatpush2.msra.mxu0 0.0
        %1796 = vmatprep.subr.mxu0 0.0
        %1797 = vmatpush2.msra.mxu0 0.0
        %1798 = vmatprep.subr.mxu0 0.0
        %1799 = vmatpush2.msra.mxu0 0.0
        %1800 = vmatprep.subr.mxu0 0.0
        %1801 = vmatpush2.msra.mxu0 0.0
        %1802 = vmatprep.subr.mxu0 0.0
        %1803 = vmatpush2.msra.mxu0 0.0
        %1804 = vmatprep.mubr.f32.mxu0 0.0
        %1805 = vmatmul.mubr.f32.gmra.mxu0 %v1738
        %v1806 = vpop.f32.mrf.mxu0
        %v1807 = vadd.f32 0.0, %v1806
        %v1808 = vpop.f32.mrf.mxu0
        %1809 = vdwg.mxu0
        %v1811 = vsel %vm1378, %v1734, 0
        %1813 = vmatprep.subr.mxu0 0.0
        %1814 = vmatpush1.msra.mxu0 0.0
        %1815 = vmatprep.subr.mxu0 0.0
        %1816 = vmatpush1.msra.mxu0 0.0
        %1817 = vmatprep.subr.mxu0 0.0
        %1818 = vmatpush1.msra.mxu0 0.0
        %1819 = vmatprep.subr.mxu0 0.0
        %1820 = vmatpush1.msra.mxu0 0.0
        %1821 = vmatprep.subr.mxu0 0.0
        %1822 = vmatpush1.msra.mxu0 0.0
        %1823 = vmatprep.subr.mxu0 0.0
        %1824 = vmatpush1.msra.mxu0 0.0
        %1825 = vmatprep.subr.mxu0 0.0
        %1826 = vmatpush1.msra.mxu0 0.0
        %1827 = vmatprep.subr.mxu0 0.0
        %1828 = vmatpush1.msra.mxu0 0.0
        %1829 = vmatprep.subr.mxu0 0.0
        %1830 = vmatpush1.msra.mxu0 0.0
        %1831 = vmatprep.subr.mxu0 0.0
        %1832 = vmatpush1.msra.mxu0 0.0
        %1833 = vmatprep.subr.mxu0 0.0
        %1834 = vmatpush1.msra.mxu0 0.0
        %1835 = vmatprep.subr.mxu0 0.0
        %1836 = vmatpush1.msra.mxu0 0.0
        %1837 = vmatprep.subr.mxu0 0.0
        %1838 = vmatpush1.msra.mxu0 0.0
        %1839 = vmatprep.subr.mxu0 0.0
        %1840 = vmatpush1.msra.mxu0 0.0
        %1841 = vmatprep.subr.mxu0 0.0
        %1842 = vmatpush1.msra.mxu0 0.0
        %1843 = vmatprep.subr.mxu0 0.0
        %1844 = vmatpush1.msra.mxu0 %v1366
        %1845 = vmatprep.subr.mxu0 0.0
        %1846 = vmatpush2.msra.mxu0 0.0
        %1847 = vmatprep.subr.mxu0 0.0
        %1848 = vmatpush2.msra.mxu0 0.0
        %1849 = vmatprep.subr.mxu0 0.0
        %1850 = vmatpush2.msra.mxu0 0.0
        %1851 = vmatprep.subr.mxu0 0.0
        %1852 = vmatpush2.msra.mxu0 0.0
        %1853 = vmatprep.subr.mxu0 0.0
        %1854 = vmatpush2.msra.mxu0 0.0
        %1855 = vmatprep.subr.mxu0 0.0
        %1856 = vmatpush2.msra.mxu0 0.0
        %1857 = vmatprep.subr.mxu0 0.0
        %1858 = vmatpush2.msra.mxu0 0.0
        %1859 = vmatprep.subr.mxu0 0.0
        %1860 = vmatpush2.msra.mxu0 0.0
        %1861 = vmatprep.subr.mxu0 0.0
        %1862 = vmatpush2.msra.mxu0 0.0
        %1863 = vmatprep.subr.mxu0 0.0
        %1864 = vmatpush2.msra.mxu0 0.0
        %1865 = vmatprep.subr.mxu0 0.0
        %1866 = vmatpush2.msra.mxu0 0.0
        %1867 = vmatprep.subr.mxu0 0.0
        %1868 = vmatpush2.msra.mxu0 0.0
        %1869 = vmatprep.subr.mxu0 0.0
        %1870 = vmatpush2.msra.mxu0 0.0
        %1871 = vmatprep.subr.mxu0 0.0
        %1872 = vmatpush2.msra.mxu0 0.0
        %1873 = vmatprep.subr.mxu0 0.0
        %1874 = vmatpush2.msra.mxu0 0.0
        %1875 = vmatprep.subr.mxu0 0.0
        %1876 = vmatpush2.msra.mxu0 0.0
        %1877 = vmatprep.mubr.f32.mxu0 0.0
        %1878 = vmatmul.mubr.f32.gmra.mxu0 %v1811
        %v1879 = vpop.f32.mrf.mxu0
        %v1880 = vadd.f32 0.0, %v1879
        %v1881 = vpop.f32.mrf.mxu0
        %1882 = vdwg.mxu0
        %v1884 = vsel %vm1378, %v1735, 0
        %1886 = vmatprep.subr.mxu0 0.0
        %1887 = vmatpush1.msra.mxu0 0.0
        %1888 = vmatprep.subr.mxu0 0.0
        %1889 = vmatpush1.msra.mxu0 0.0
        %1890 = vmatprep.subr.mxu0 0.0
        %1891 = vmatpush1.msra.mxu0 0.0
        %1892 = vmatprep.subr.mxu0 0.0
        %1893 = vmatpush1.msra.mxu0 0.0
        %1894 = vmatprep.subr.mxu0 0.0
        %1895 = vmatpush1.msra.mxu0 0.0
        %1896 = vmatprep.subr.mxu0 0.0
        %1897 = vmatpush1.msra.mxu0 0.0
        %1898 = vmatprep.subr.mxu0 0.0
        %1899 = vmatpush1.msra.mxu0 0.0
        %1900 = vmatprep.subr.mxu0 0.0
        %1901 = vmatpush1.msra.mxu0 0.0
        %1902 = vmatprep.subr.mxu0 0.0
        %1903 = vmatpush1.msra.mxu0 0.0
        %1904 = vmatprep.subr.mxu0 0.0
        %1905 = vmatpush1.msra.mxu0 0.0
        %1906 = vmatprep.subr.mxu0 0.0
        %1907 = vmatpush1.msra.mxu0 0.0
        %1908 = vmatprep.subr.mxu0 0.0
        %1909 = vmatpush1.msra.mxu0 0.0
        %1910 = vmatprep.subr.mxu0 0.0
        %1911 = vmatpush1.msra.mxu0 0.0
        %1912 = vmatprep.subr.mxu0 0.0
        %1913 = vmatpush1.msra.mxu0 0.0
        %1914 = vmatprep.subr.mxu0 0.0
        %1915 = vmatpush1.msra.mxu0 0.0
        %1916 = vmatprep.subr.mxu0 0.0
        %1917 = vmatpush1.msra.mxu0 %v1367
        %1918 = vmatprep.subr.mxu0 0.0
        %1919 = vmatpush2.msra.mxu0 0.0
        %1920 = vmatprep.subr.mxu0 0.0
        %1921 = vmatpush2.msra.mxu0 0.0
        %1922 = vmatprep.subr.mxu0 0.0
        %1923 = vmatpush2.msra.mxu0 0.0
        %1924 = vmatprep.subr.mxu0 0.0
        %1925 = vmatpush2.msra.mxu0 0.0
        %1926 = vmatprep.subr.mxu0 0.0
        %1927 = vmatpush2.msra.mxu0 0.0
        %1928 = vmatprep.subr.mxu0 0.0
        %1929 = vmatpush2.msra.mxu0 0.0
        %1930 = vmatprep.subr.mxu0 0.0
        %1931 = vmatpush2.msra.mxu0 0.0
        %1932 = vmatprep.subr.mxu0 0.0
        %1933 = vmatpush2.msra.mxu0 0.0
        %1934 = vmatprep.subr.mxu0 0.0
        %1935 = vmatpush2.msra.mxu0 0.0
        %1936 = vmatprep.subr.mxu0 0.0
        %1937 = vmatpush2.msra.mxu0 0.0
        %1938 = vmatprep.subr.mxu0 0.0
        %1939 = vmatpush2.msra.mxu0 0.0
        %1940 = vmatprep.subr.mxu0 0.0
        %1941 = vmatpush2.msra.mxu0 0.0
        %1942 = vmatprep.subr.mxu0 0.0
        %1943 = vmatpush2.msra.mxu0 0.0
        %1944 = vmatprep.subr.mxu0 0.0
        %1945 = vmatpush2.msra.mxu0 0.0
        %1946 = vmatprep.subr.mxu0 0.0
        %1947 = vmatpush2.msra.mxu0 0.0
        %1948 = vmatprep.subr.mxu0 0.0
        %1949 = vmatpush2.msra.mxu0 0.0
        %1950 = vmatprep.mubr.f32.mxu0 0.0
        %1951 = vmatmul.mubr.f32.gmra.mxu0 %v1884
        %v1952 = vpop.f32.mrf.mxu0
        %v1953 = vadd.f32 0.0, %v1952
        %v1954 = vpop.f32.mrf.mxu0
        %1955 = vdwg.mxu0
        %v1957 = vsel %vm1378, %v1736, 0
        %1959 = vmatprep.subr.mxu0 0.0
        %1960 = vmatpush1.msra.mxu0 0.0
        %1961 = vmatprep.subr.mxu0 0.0
        %1962 = vmatpush1.msra.mxu0 0.0
        %1963 = vmatprep.subr.mxu0 0.0
        %1964 = vmatpush1.msra.mxu0 0.0
        %1965 = vmatprep.subr.mxu0 0.0
        %1966 = vmatpush1.msra.mxu0 0.0
        %1967 = vmatprep.subr.mxu0 0.0
        %1968 = vmatpush1.msra.mxu0 0.0
        %1969 = vmatprep.subr.mxu0 0.0
        %1970 = vmatpush1.msra.mxu0 0.0
        %1971 = vmatprep.subr.mxu0 0.0
        %1972 = vmatpush1.msra.mxu0 0.0
        %1973 = vmatprep.subr.mxu0 0.0
        %1974 = vmatpush1.msra.mxu0 0.0
        %1975 = vmatprep.subr.mxu0 0.0
        %1976 = vmatpush1.msra.mxu0 0.0
        %1977 = vmatprep.subr.mxu0 0.0
        %1978 = vmatpush1.msra.mxu0 0.0
        %1979 = vmatprep.subr.mxu0 0.0
        %1980 = vmatpush1.msra.mxu0 0.0
        %1981 = vmatprep.subr.mxu0 0.0
        %1982 = vmatpush1.msra.mxu0 0.0
        %1983 = vmatprep.subr.mxu0 0.0
        %1984 = vmatpush1.msra.mxu0 0.0
        %1985 = vmatprep.subr.mxu0 0.0
        %1986 = vmatpush1.msra.mxu0 0.0
        %1987 = vmatprep.subr.mxu0 0.0
        %1988 = vmatpush1.msra.mxu0 0.0
        %1989 = vmatprep.subr.mxu0 0.0
        %1990 = vmatpush1.msra.mxu0 %v1368
        %1991 = vmatprep.subr.mxu0 0.0
        %1992 = vmatpush2.msra.mxu0 0.0
        %1993 = vmatprep.subr.mxu0 0.0
        %1994 = vmatpush2.msra.mxu0 0.0
        %1995 = vmatprep.subr.mxu0 0.0
        %1996 = vmatpush2.msra.mxu0 0.0
        %1997 = vmatprep.subr.mxu0 0.0
        %1998 = vmatpush2.msra.mxu0 0.0
        %1999 = vmatprep.subr.mxu0 0.0
        %2000 = vmatpush2.msra.mxu0 0.0
        %2001 = vmatprep.subr.mxu0 0.0
        %2002 = vmatpush2.msra.mxu0 0.0
        %2003 = vmatprep.subr.mxu0 0.0
        %2004 = vmatpush2.msra.mxu0 0.0
        %2005 = vmatprep.subr.mxu0 0.0
        %2006 = vmatpush2.msra.mxu0 0.0
        %2007 = vmatprep.subr.mxu0 0.0
        %2008 = vmatpush2.msra.mxu0 0.0
        %2009 = vmatprep.subr.mxu0 0.0
        %2010 = vmatpush2.msra.mxu0 0.0
        %2011 = vmatprep.subr.mxu0 0.0
        %2012 = vmatpush2.msra.mxu0 0.0
        %2013 = vmatprep.subr.mxu0 0.0
        %2014 = vmatpush2.msra.mxu0 0.0
        %2015 = vmatprep.subr.mxu0 0.0
        %2016 = vmatpush2.msra.mxu0 0.0
        %2017 = vmatprep.subr.mxu0 0.0
        %2018 = vmatpush2.msra.mxu0 0.0
        %2019 = vmatprep.subr.mxu0 0.0
        %2020 = vmatpush2.msra.mxu0 0.0
        %2021 = vmatprep.subr.mxu0 0.0
        %2022 = vmatpush2.msra.mxu0 0.0
        %2023 = vmatprep.mubr.f32.mxu0 0.0
        %2024 = vmatmul.mubr.f32.gmra.mxu0 %v1957
        %v2025 = vpop.f32.mrf.mxu0
        %v2026 = vadd.f32 0.0, %v2025
        %v2027 = vpop.f32.mrf.mxu0
        %2028 = vdwg.mxu0
        %v2029 = vcombine.low %v1807, %v1953
        %v2030 = vcombine.high %v1807, %v1953
        %v2032 = vunpack.c.l.s4 1983009808
        %v2033 = vunpack.c.0.s8 %v2032
        %v2034 = vlaneseq
        %v2035 = vshrl.u32 %v2034, 7
        %v2036 = vsub.s32 %v2033, %v2035
        %v2037 = vrot.slane %v2029, %v2036
        %v2039 = vunpack.c.l.s4 1983009808
        %v2040 = vunpack.c.0.s8 %v2039
        %v2041 = vlaneseq
        %v2042 = vshrl.u32 %v2041, 7
        %v2043 = vsub.s32 %v2040, %v2042
        %v2044 = vrot.slane %v2030, %v2043
        %v2045 = vcombine.low %v1880, %v2026
        %v2046 = vcombine.high %v1880, %v2026
        %v2048 = vunpack.c.l.s4 1983009808
        %v2049 = vunpack.c.0.s8 %v2048
        %v2050 = vlaneseq
        %v2051 = vshrl.u32 %v2050, 7
        %v2052 = vsub.s32 %v2049, %v2051
        %v2053 = vrot.slane %v2045, %v2052
        %v2055 = vunpack.c.l.s4 1983009808
        %v2056 = vunpack.c.0.s8 %v2055
        %v2057 = vlaneseq
        %v2058 = vshrl.u32 %v2057, 7
        %v2059 = vsub.s32 %v2056, %v2058
        %v2060 = vrot.slane %v2046, %v2059
        %v2061 = vcombine.low %v2037, %v2053
        %v2062 = vcombine.high %v2037, %v2053
        %v2064 = vunpack.c.l.s4 1934713408
        %v2065 = vunpack.c.0.s8 %v2064
        %v2066 = vlaneseq
        %v2067 = vshrl.u32 %v2066, 7
        %v2068 = vsub.s32 %v2065, %v2067
        %v2069 = vrot.slane %v2061, %v2068
        %v2071 = vunpack.c.l.s4 1934713408
        %v2072 = vunpack.c.0.s8 %v2071
        %v2073 = vlaneseq
        %v2074 = vshrl.u32 %v2073, 7
        %v2075 = vsub.s32 %v2072, %v2074
        %v2076 = vrot.slane %v2062, %v2075
        %v2077 = vcombine.low %v2044, %v2060
        %v2078 = vcombine.high %v2044, %v2060
        %v2080 = vunpack.c.l.s4 1934713408
        %v2081 = vunpack.c.0.s8 %v2080
        %v2082 = vlaneseq
        %v2083 = vshrl.u32 %v2082, 7
        %v2084 = vsub.s32 %v2081, %v2083
        %v2085 = vrot.slane %v2077, %v2084
        %v2087 = vunpack.c.l.s4 1934713408
        %v2088 = vunpack.c.0.s8 %v2087
        %v2089 = vlaneseq
        %v2090 = vshrl.u32 %v2089, 7
        %v2091 = vsub.s32 %v2088, %v2090
        %v2092 = vrot.slane %v2078, %v2091
        %v2093 = vcombine.high %v2069, 0.0
        %v2094 = vcombine.high %v2076, 0.0
        %v2095 = vcombine.high %v2085, 0.0
        %v2096 = vcombine.high %v2092, 0.0
        %v2097 = vcombine.low %v2069, %v2076
        %v2099 = vunpack.c.l.s4 1983009808
        %v2100 = vunpack.c.0.s8 %v2099
        %v2101 = vlaneseq
        %v2102 = vshrl.u32 %v2101, 7
        %v2103 = vsub.s32 %v2100, %v2102
        %v2104 = vrot.slane %v2097, %v2103
        %v2105 = vcombine.low %v2093, %v2094
        %v2107 = vunpack.c.l.s4 1983009808
        %v2108 = vunpack.c.0.s8 %v2107
        %v2109 = vlaneseq
        %v2110 = vshrl.u32 %v2109, 7
        %v2111 = vsub.s32 %v2108, %v2110
        %v2112 = vrot.slane %v2105, %v2111
        %v2113 = vcombine.low %v2085, %v2092
        %v2115 = vunpack.c.l.s4 1983009808
        %v2116 = vunpack.c.0.s8 %v2115
        %v2117 = vlaneseq
        %v2118 = vshrl.u32 %v2117, 7
        %v2119 = vsub.s32 %v2116, %v2118
        %v2120 = vrot.slane %v2113, %v2119
        %v2121 = vcombine.low %v2095, %v2096
        %v2123 = vunpack.c.l.s4 1983009808
        %v2124 = vunpack.c.0.s8 %v2123
        %v2125 = vlaneseq
        %v2126 = vshrl.u32 %v2125, 7
        %v2127 = vsub.s32 %v2124, %v2126
        %v2128 = vrot.slane %v2121, %v2127
        %v2129 = vcombine.low %v2104, %v2112
        %v2130 = vcombine.high %v2104, %v2112
        %v2132 = vunpack.c.l.s4 1934713408
        %v2133 = vunpack.c.0.s8 %v2132
        %v2134 = vlaneseq
        %v2135 = vshrl.u32 %v2134, 7
        %v2136 = vsub.s32 %v2133, %v2135
        %v2137 = vrot.slane %v2129, %v2136
        %v2139 = vunpack.c.l.s4 1934713408
        %v2140 = vunpack.c.0.s8 %v2139
        %v2141 = vlaneseq
        %v2142 = vshrl.u32 %v2141, 7
        %v2143 = vsub.s32 %v2140, %v2142
        %v2144 = vrot.slane %v2130, %v2143
        %v2145 = vcombine.low %v2120, %v2128
        %v2146 = vcombine.high %v2120, %v2128
        %v2148 = vunpack.c.l.s4 1934713408
        %v2149 = vunpack.c.0.s8 %v2148
        %v2150 = vlaneseq
        %v2151 = vshrl.u32 %v2150, 7
        %v2152 = vsub.s32 %v2149, %v2151
        %v2153 = vrot.slane %v2145, %v2152
        %v2155 = vunpack.c.l.s4 1934713408
        %v2156 = vunpack.c.0.s8 %v2155
        %v2157 = vlaneseq
        %v2158 = vshrl.u32 %v2157, 7
        %v2159 = vsub.s32 %v2156, %v2158
        %v2160 = vrot.slane %v2146, %v2159
        %v2161 = vcombine.low %v2137, %v2153
        %v2162 = vcombine.high %v2137, %v2153
        %v2163 = vcombine.low %v2144, %v2160
        %v2164 = vcombine.high %v2144, %v2160
        %2166 = vrot.lane.b32.xlu0 %v2162, 8
        %v2167 = vpop.permute.xlu0 %2166
        %2170 = vrot.lane.b32.xlu0 %v2163, 16
        %v2171 = vpop.permute.xlu0 %2170
        %2174 = vrot.lane.b32.xlu0 %v2164, 24
        %v2175 = vpop.permute.xlu0 %2174
        %v2177 = vsel %vm1378, %v2161, %v2167
        %vm2178 = vcmask 130048
        %v2179 = vsel %vm2178, %v2177, %v2171
        %vm2180 = vcmask 195584
        %v2181 = vsel %vm2180, %v2179, %v2175
        %v2182 = vld [vmem:[#allocation15] sm:$0xff]
        %v2183 = vld [vmem:[#allocation15 + $0x8] sm:$0xff]
        %v2184 = vld [vmem:[#allocation15 + $0x10] sm:$0xff]
        %v2185 = vld [vmem:[#allocation15 + $0x18] sm:$0xff]
        %v2186 = vld [vmem:[%s11] sm:$0x1]
        %v2188 = vlaneseq
        %v2189 = vshrl.u32 %v2188, 7
        %v2190 = vsub.s32 0, %v2189
        %v2191 = vrot.slane %v2186, %v2190
        %v2194 = vsel %vm1140, %v2181, 0
        %2196 = vmatprep.subr.mxu0 0.0
        %2197 = vmatpush1.msra.mxu0 0.0
        %2198 = vmatprep.subr.mxu0 0.0
        %2199 = vmatpush1.msra.mxu0 0.0
        %2200 = vmatprep.subr.mxu0 0.0
        %2201 = vmatpush1.msra.mxu0 0.0
        %2202 = vmatprep.subr.mxu0 0.0
        %2203 = vmatpush1.msra.mxu0 0.0
        %2204 = vmatprep.subr.mxu0 0.0
        %2205 = vmatpush1.msra.mxu0 0.0
        %2206 = vmatprep.subr.mxu0 0.0
        %2207 = vmatpush1.msra.mxu0 0.0
        %2208 = vmatprep.subr.mxu0 0.0
        %2209 = vmatpush1.msra.mxu0 0.0
        %2210 = vmatprep.subr.mxu0 0.0
        %2211 = vmatpush1.msra.mxu0 0.0
        %2212 = vmatprep.subr.mxu0 0.0
        %2213 = vmatpush1.msra.mxu0 0.0
        %2214 = vmatprep.subr.mxu0 0.0
        %2215 = vmatpush1.msra.mxu0 0.0
        %2216 = vmatprep.subr.mxu0 0.0
        %2217 = vmatpush1.msra.mxu0 0.0
        %2218 = vmatprep.subr.mxu0 0.0
        %2219 = vmatpush1.msra.mxu0 0.0
        %2220 = vmatprep.subr.mxu0 0.0
        %2221 = vmatpush1.msra.mxu0 %v2185
        %2222 = vmatprep.subr.mxu0 0.0
        %2223 = vmatpush1.msra.mxu0 %v2184
        %2224 = vmatprep.subr.mxu0 0.0
        %2225 = vmatpush1.msra.mxu0 %v2183
        %2226 = vmatprep.subr.mxu0 0.0
        %2227 = vmatpush1.msra.mxu0 %v2182
        %2228 = vmatprep.subr.mxu0 0.0
        %2229 = vmatpush2.msra.mxu0 0.0
        %2230 = vmatprep.subr.mxu0 0.0
        %2231 = vmatpush2.msra.mxu0 0.0
        %2232 = vmatprep.subr.mxu0 0.0
        %2233 = vmatpush2.msra.mxu0 0.0
        %2234 = vmatprep.subr.mxu0 0.0
        %2235 = vmatpush2.msra.mxu0 0.0
        %2236 = vmatprep.subr.mxu0 0.0
        %2237 = vmatpush2.msra.mxu0 0.0
        %2238 = vmatprep.subr.mxu0 0.0
        %2239 = vmatpush2.msra.mxu0 0.0
        %2240 = vmatprep.subr.mxu0 0.0
        %2241 = vmatpush2.msra.mxu0 0.0
        %2242 = vmatprep.subr.mxu0 0.0
        %2243 = vmatpush2.msra.mxu0 0.0
        %2244 = vmatprep.subr.mxu0 0.0
        %2245 = vmatpush2.msra.mxu0 0.0
        %2246 = vmatprep.subr.mxu0 0.0
        %2247 = vmatpush2.msra.mxu0 0.0
        %2248 = vmatprep.subr.mxu0 0.0
        %2249 = vmatpush2.msra.mxu0 0.0
        %2250 = vmatprep.subr.mxu0 0.0
        %2251 = vmatpush2.msra.mxu0 0.0
        %2252 = vmatprep.subr.mxu0 0.0
        %2253 = vmatpush2.msra.mxu0 0.0
        %2254 = vmatprep.subr.mxu0 0.0
        %2255 = vmatpush2.msra.mxu0 0.0
        %2256 = vmatprep.subr.mxu0 0.0
        %2257 = vmatpush2.msra.mxu0 0.0
        %2258 = vmatprep.subr.mxu0 0.0
        %2259 = vmatpush2.msra.mxu0 0.0
        %2260 = vmatprep.mubr.f32.mxu0 0.0
        %2261 = vmatmul.mubr.f32.gmra.mxu0 %v2194
        %v2262 = vpop.f32.mrf.mxu0
        %v2263 = vadd.f32 %v2191, %v2262
        %v2264 = vpop.f32.mrf.mxu0
        %2265 = vdwg.mxu0
        %2266 = vst.msk [vmem:[%s616] sm:$0xff] %vm1140, %v2263
        %s2267 = sand.u32 %s335, 1
        %s2268 = scalar_lea.sflag [#allocation6], %s2267
        %s2269 = sand.u32 %s335, 1
        %s2270 = smul.addr %s2269, 8
        %s2271 = scalar_lea.vmem [#allocation16], %s2270
        %s2272 = sand.u32 %s361, 1
        %s2273 = scalar_lea.sflag [#allocation18], %s2272
        %s2274 = sand.u32 %s361, 1
        %s2275 = smul.addr %s2274, 32
        %s2276 = scalar_lea.vmem [#allocation17], %s2275
        // Predicated region
        $region101: #{tpu_custom_call.1} parent=67 // pred_check
          %p2277 = pneg %p345
        $region102: #{tpu_custom_call.1} parent=67 // pred_check_branch
          %2279 = sbr.rel (%p2277) target = $region104
        $region103: #{tpu_custom_call.1} parent=67 // pred_region
          %s2281 = ssub.s32 128, 128
          %2282 = vsyncadd %s2268, %s2281
          %s2283 = sadd.s32 %s44, %s43
          %s2284 = smul.addr %s2283, 128
          %s2285 = scalar_lea.hbm %s12, %s2284
          %s2287 = sshll.u32 %s2271, 4
          %s2288 = int_to_ptr.vmem [resolvable:$true] %s2287
          %2290 = dma.vmem_to_hbm [thread:$0]  %s2288, 128, %s2285, %s2268
        $region104: #{tpu_custom_call.1} parent=67 // pred_fallthru
          _
        // Predicated region
        $region105: #{tpu_custom_call.1} parent=67 // pred_check
          %p2291 = pneg %p371
        $region106: #{tpu_custom_call.1} parent=67 // pred_check_branch
          %2293 = sbr.rel (%p2291) target = $region108
        $region107: #{tpu_custom_call.1} parent=67 // pred_region
          %s2295 = ssub.s32 512, 512
          %2296 = vsyncadd %s2273, %s2295
          %s2297 = smul.addr %s43, 4
          %s2298 = smul.addr %s2297, 128
          %s2299 = scalar_lea.hbm %s13, %s2298
          %s2300 = sshll.u32 %s2276, 4
          %s2301 = int_to_ptr.vmem [resolvable:$true] %s2300
          %2306 = dma.vmem_to_hbm [thread:$0]  %s2301, 512, %s2299, %s2273, 128, 128, 8
        $region108: #{tpu_custom_call.1} parent=67 // pred_fallthru
          _
      $region68: #{tpu_custom_call.1} parent=5 // pred_fallthru
        _
      %p2307 = scmp.le.s32.totalorder 2, %s34
      // Predicated region
      $region109: #{tpu_custom_call.1} parent=5 // pred_check
        %p2308 = pneg %p2307
      $region110: #{tpu_custom_call.1} parent=5 // pred_check_branch
        %2310 = sbr.rel (%p2308) target = $region112
      $region111: #{tpu_custom_call.1} parent=5 // pred_region
        %s2311 = ssub.s32 %s34, 2
        // Predicated region
        $region113: #{tpu_custom_call.1} parent=111 // pred_check
          %p2312 = pneg %p351
        $region114: #{tpu_custom_call.1} parent=111 // pred_check_branch
          %2314 = sbr.rel (%p2312) target = $region116
        $region115: #{tpu_custom_call.1} parent=111 // pred_region
          %s2315 = sand.u32 %s336, 1
          %s2316 = scalar_lea.sflag [#allocation6], %s2315
          %s2317 = sand.u32 %s336, 1
          %s2318 = smul.addr %s2317, 8
          %s2319 = scalar_lea.vmem [#allocation16], %s2318
          %2320 = dma.done %s2316, 128
        $region116: #{tpu_custom_call.1} parent=111 // pred_fallthru
          _
        // Predicated region
        $region117: #{tpu_custom_call.1} parent=111 // pred_check
          %p2321 = pneg %p377
        $region118: #{tpu_custom_call.1} parent=111 // pred_check_branch
          %2323 = sbr.rel (%p2321) target = $region120
        $region119: #{tpu_custom_call.1} parent=111 // pred_region
          %s2324 = sand.u32 %s362, 1
          %s2325 = scalar_lea.sflag [#allocation18], %s2324
          %s2326 = sand.u32 %s362, 1
          %s2327 = smul.addr %s2326, 32
          %s2328 = scalar_lea.vmem [#allocation17], %s2327
          %2329 = dma.done %s2325, 512
        $region120: #{tpu_custom_call.1} parent=111 // pred_fallthru
          _
      $region112: #{tpu_custom_call.1} parent=5 // pred_fallthru
        _
    $region6: #{tpu_custom_call.1} parent=1 // loop_footer
      %s38 = sadd.s32 1, %s34
    $region7: #{tpu_custom_call.1} parent=1 // loop_footer_branch
      %33 = sbr.rel target = $region3
    $region8: #{tpu_custom_call.1} parent=1 // loop_exit
      _
    %2330 = vsyncpa [#allocation5], 1
    %s2331 = scalar_lea.sflag [#allocation5], 1
    %2332 = vsyncpa %s2331, 1
    %2333 = vsyncpa [#allocation8], 1
    %s2334 = scalar_lea.sflag [#allocation8], 1
    %2335 = vsyncpa %s2334, 1
    %2336 = vsyncpa [#allocation11], 1
    %2337 = vsyncpa [#allocation14], 1
    %2338 = vsyncpa [#allocation6], 1
    %s2339 = scalar_lea.sflag [#allocation6], 1
    %2340 = vsyncpa %s2339, 1
    %2341 = vsyncpa [#allocation18], 1
    %s2342 = scalar_lea.sflag [#allocation18], 1
    %2343 = vsyncpa %s2342, 1

</llo_original>
